<compile_context>
chip_gen: v5e
topology: v5e:2x2
jax: 0.10.0
libtpu: 0.0.40
codegen_flags: <defaults>
</compile_context>

<pallas_src>
import jax
import jax.numpy as jnp
from jax import lax
from jax.experimental import pallas as pl
from jax.experimental.pallas import tpu as pltpu


_NEG_BIG = -1e30   # finite "-inf": avoids NaN rows for 0-length encoder inputs


# ----------------------------------------------------------------------------
# Fused Pallas kernel: the entire greedy decode loop
# ----------------------------------------------------------------------------
def _fused_decoder_kernel(
    tok0_ref,      # [1, E]    token_embedding.weight (start-token row)
    emb_ref,       # [V, E]    embedding.weight (next-token lookup table)
    h0_ref,        # [B, H]    encoder hidden h (layer 0) - reused every step
    c0_ref,        # [B, H]    encoder hidden c (layer 0) - reused every step
    enc_ref,       # [B, S, H] encoder outputs, batch-first
    lens_ref,      # [B, 1]    int32 valid encoder lengths
    w_ih_ref,      # [E, 4H]   fused input->hidden LSTM weights (gate order i,f,g,o)
    w_hh_ref,      # [H, 4H]   fused hidden->hidden LSTM weights
    b_g_ref,       # [1, 4H]   fused gate bias (b_ih + b_hh)
    w_enc_ref,     # [H, H]    encoderLinear
    b_enc_ref,     # [1, H]
    w_dec_ref,     # [H, H]    decoderLinear
    b_dec_ref,     # [1, H]
    w_attn_ref,    # [H, 1]    attnLinear (stored column-major for the MXU)
    b_attn_ref,    # [1, 1]
    w_out2_ref,    # [2, H, V] out=Linear(2H,V); [0]: context half, [1]: lstm half
    b_out_ref,     # [1, V]
    # outputs
    pred_ref,      # [B, T] int32   argmax token per step (caller transposes -> [T,B])
    attn_ref,      # [B, T, S] f32  attention weights, already in caller layout
    scal_ref,      # [B, 2] f32     col0 = total neg-entropy, col1 = total log-prob
    # scratch
    enc_t_ref,     # [B, S, H] f32  hoisted encoder projection (VMEM resident)
):
    B, H = h0_ref.shape
    _, S, _ = enc_ref.shape
    V, E = emb_ref.shape
    T = pred_ref.shape[1]
    f32 = jnp.float32

    # ---------------- step-invariant precompute (hoisted) ----------------
    # encoder projection: done once instead of T times; kept in VMEM scratch.
    enc_t_ref[...] = (
        jnp.dot(enc_ref[...].reshape(B * S, H), w_enc_ref[...],
                preferred_element_type=f32)
        + b_enc_ref[...]
    ).reshape(B, S, H)

    # recurrent gate contribution: prev_hidden == encoder_hidden on every step
    # in the reference forward(), so h0 @ W_hh (+bias) is loop-invariant.
    hh = jnp.dot(h0_ref[...], w_hh_ref[...], preferred_element_type=f32) + b_g_ref[...]

    # attention mask (+ attnLinear bias, kept for fidelity though it cancels).
    s_idx = lax.broadcasted_iota(jnp.int32, (B, S), 1)
    mask_bias = (jnp.where(s_idx >= lens_ref[...], _NEG_BIG, 0.0).astype(f32)
                 + b_attn_ref[...])                      # [B, S]
    v_idx = lax.broadcasted_iota(jnp.int32, (B, V), 1)   # [B, V]

    embed = jnp.broadcast_to(tok0_ref[...], (B, E)).astype(f32)
    tot_ne = jnp.zeros((B, 1), f32)
    tot_lp = jnp.zeros((B, 1), f32)
    pred_cols = []

    # TODO(synk): at realistic T make this a grid axis ("arbitrary") instead of
    #             a full static unroll; T is tiny here so unrolling is optimal.
    for t in range(T):
        # -- single-step LSTM cell: ONE fused [B,E]@[E,4H] gate matmul --
        gates = jnp.dot(embed, w_ih_ref[...], preferred_element_type=f32) + hh
        i_g = jax.nn.sigmoid(gates[:, 0 * H:1 * H])
        f_g = jax.nn.sigmoid(gates[:, 1 * H:2 * H])
        g_g = jnp.tanh(gates[:, 2 * H:3 * H])
        o_g = jax.nn.sigmoid(gates[:, 3 * H:4 * H])
        c_new = f_g * c0_ref[...] + i_g * g_g
        h_new = o_g * jnp.tanh(c_new)                    # [B, H] == lstm output

        # -- additive attention; score reduction on the MXU --
        out_t = (jnp.dot(h_new, w_dec_ref[...], preferred_element_type=f32)
                 + b_dec_ref[...])
        z = jnp.tanh(enc_t_ref[...] + out_t[:, None, :])           # [B, S, H]
        raw = (jnp.dot(z.reshape(B * S, H), w_attn_ref[...],
                       preferred_element_type=f32).reshape(B, S)
               + mask_bias)                                         # [B, S]
        m = jnp.max(raw, axis=1, keepdims=True)
        e = jnp.exp(raw - m)
        attn = e / jnp.sum(e, axis=1, keepdims=True)     # exact: exported output
        attn_ref[:, pl.ds(t, 1), :] = attn[:, None, :]   # caller layout [B,T,S]

        # -- context via batched matmul (torch.bmm equivalent) --
        context = jnp.einsum('bqs,bsh->bqh', attn[:, None, :], enc_ref[...],
                             preferred_element_type=f32)[:, 0, :]   # [B, H]

        # -- output projection: two accumulated K=H matmuls (no concat) --
        logits = (jnp.dot(context, w_out2_ref[0], preferred_element_type=f32)
                  + jnp.dot(h_new, w_out2_ref[1], preferred_element_type=f32)
                  + b_out_ref[...])                                 # [B, V]

        # -- greedy token: argmax on logits (softmax-invariant, first max idx) --
        lm = jnp.max(logits, axis=1, keepdims=True)
        pred = jnp.min(jnp.where(logits == lm, v_idx, V), axis=1, keepdims=True)
        pred_cols.append(pred)                                      # [B, 1] int32

        # -- scalars from logits, exact log-sum-exp (no per-V logs, no epsilon) --
        shifted = logits - lm
        le = jnp.exp(shifted)
        z_sum = jnp.sum(le, axis=1, keepdims=True)
        log_z = jnp.log(z_sum)
        tot_lp = tot_lp - log_z                          # log p[argmax] = -log Z
        tot_ne = tot_ne + (jnp.sum(le * shifted, axis=1, keepdims=True) / z_sum
                           - log_z)                      # sum_v p_v log p_v

        # -- next-token embedding lookup --
        # TODO(synk): at real V replace with a row gather from emb_ref instead
        #             of a one_hot matmul (saves 2*B*V*E MXU FLOPs per step).
        one_hot = (v_idx == pred).astype(f32)
        embed = jnp.dot(one_hot, emb_ref[...], preferred_element_type=f32)

    # single lane-dense writeback of all predictions + both scalars.
    pred_ref[...] = jnp.concatenate(pred_cols, axis=1)              # [B, T]
    scal_ref[...] = jnp.concatenate([tot_ne, tot_lp], axis=1)       # [B, 2]


# ----------------------------------------------------------------------------
# Forward pass (greedy decoding, layout_variable=None, sample_token=False)
# ----------------------------------------------------------------------------
def attn_decoder_forward(params, encoder_hidden, encoder_outputs, encoder_lens,
                         max_decoder_len):
    h_n, c_n = encoder_hidden                     # each [1, B, H]
    S, B, H = encoder_outputs.shape
    E = params["token_embedding"].shape[1]
    V = params["embedding"].shape[0]
    T = int(max_decoder_len)

    enc_bsh = jnp.transpose(encoder_outputs, (1, 0, 2))       # [B, S, H]
    lens = jnp.asarray(encoder_lens, jnp.int32).reshape(B, 1)

    inputs = (
        params["token_embedding"], params["embedding"],
        h_n[0], c_n[0], enc_bsh, lens,
        params["w_ih"], params["w_hh"], params["b_g"],
        params["w_enc"], params["b_enc"],
        params["w_dec"], params["b_dec"],
        params["w_attn"], params["b_attn"],
        params["w_out2"], params["b_out"],
    )
    out_shape = (
        jax.ShapeDtypeStruct((B, T), jnp.int32),
        jax.ShapeDtypeStruct((B, T, S), jnp.float32),
        jax.ShapeDtypeStruct((B, 2), jnp.float32),
    )
    vmem = pl.BlockSpec(memory_space=pltpu.MemorySpace.VMEM)

    # VMEM budget sized to the actual resident set (whole-array residency).
    in_bytes = sum(int(a.size) * a.dtype.itemsize for a in inputs)
    out_bytes = (B * T) * 4 + (B * T * S) * 4 + (B * 2) * 4
    scratch_bytes = B * S * H * 4
    vmem_limit = int(min(64 * 2**20,
                         max(4 * 2**20,
                             2 * (in_bytes + out_bytes + scratch_bytes) + (1 << 20))))

    # Advisory cost estimate so XLA schedules the surrounding glue sensibly.
    flops_hoist = 2 * B * S * H * H + 2 * B * H * 4 * H
    flops_step = (2 * B * E * 4 * H          # fused gate matmul
                  + 2 * B * H * H            # h_new @ W_dec
                  + 2 * B * S * H            # attention score contraction
                  + 2 * B * S * H            # context bmm
                  + 4 * B * H * V            # two output-projection matmuls
                  + 2 * B * V * E            # next-token embedding lookup
                  + 10 * B * V + 8 * B * S)
    transc = T * B * (5 * H + S * H + S + V + 2)
    cost = pl.CostEstimate(flops=int(flops_hoist + T * flops_step),
                           transcendentals=int(transc),
                           bytes_accessed=int(in_bytes + out_bytes))

    pred, attn, scal = pl.pallas_call(
        _fused_decoder_kernel,
        out_shape=out_shape,
        in_specs=[vmem] * len(inputs),
        out_specs=tuple([vmem] * 3),
        scratch_shapes=[pltpu.VMEM((B, S, H), jnp.float32)],
        compiler_params=pltpu.CompilerParams(vmem_limit_bytes=vmem_limit),
        cost_estimate=cost,
    )(*inputs)

    predicted_tokens = jnp.transpose(pred, (1, 0))     # [T, B] (tiny int32 slab)
    context_total = attn                               # [B, T, S] already caller layout
    return predicted_tokens, context_total, scal[:, 0], scal[:, 1]


# ----------------------------------------------------------------------------
# Deterministic parameter init (fused-gate LSTM layout, [in, out] matmuls)
# ----------------------------------------------------------------------------
def init_params(key, embed_dim, lstm_dim, nmn_dim):
    E, H, V = embed_dim, lstm_dim, nmn_dim
    ks = jax.random.split(key, 12)

    def rnd(k, shape, scale=0.1):
        return (scale * jax.random.normal(k, shape)).astype(jnp.float32)

    b_ih = rnd(ks[0], (1, 4 * H))
    b_hh = rnd(ks[1], (1, 4 * H))
    return {
        "token_embedding": rnd(ks[2], (1, E)),
        "embedding": rnd(ks[3], (V, E)),
        # fused LSTM weights, PyTorch gate order (i, f, g, o):
        # w_ih == weight_ih_l0.T  ([E,4H]);  w_hh == weight_hh_l0.T ([H,4H])
        "w_ih": rnd(ks[4], (E, 4 * H)),
        "w_hh": rnd(ks[5], (H, 4 * H)),
        "b_g": b_ih + b_hh,
        "w_enc": rnd(ks[6], (H, H)),
        "b_enc": rnd(ks[7], (1, H)),
        "w_dec": rnd(ks[8], (H, H)),
        "b_dec": jnp.zeros((1, H), jnp.float32),   # constant(0) init in torch
        "w_attn": rnd(ks[9], (H, 1)),              # attnLinear.weight.T
        "b_attn": jnp.zeros((1, 1), jnp.float32),  # constant(0) init in torch
        # nn.Linear(2H, V): [0] = weight[:, :H].T (context), [1] = weight[:, H:].T
        "w_out2": rnd(ks[10], (2, H, V)),
        "b_out": rnd(ks[11], (1, V)),
    }


# ----------------------------------------------------------------------------
if __name__ == "__main__":
    B = 2           # batch
    H = 32          # lstm_dim
    E = 32          # embed_dim_nmn
    S = 8           # encoder seq_len
    V = 16          # nmn_dim (output vocab)
    T_DECODER = 4   # max_decoder_len

    key = jax.random.PRNGKey(0)
    kp, ke, kh, kc = jax.random.split(key, 4)

    params = init_params(kp, E, H, V)

    encoder_outputs = jax.random.normal(ke, (S, B, H), jnp.float32)   # [S, B, H]
    h_n = jax.random.normal(kh, (1, B, H), jnp.float32)
    c_n = jax.random.normal(kc, (1, B, H), jnp.float32)
    encoder_lens = jnp.array([S, S - 3], jnp.int32)                   # valid lens

    fwd = jax.jit(attn_decoder_forward, static_argnames=("max_decoder_len",))
    out = fwd(params, (h_n, c_n), encoder_outputs, encoder_lens,
              max_decoder_len=T_DECODER)
    out = jax.block_until_ready(out)
    predicted_tokens, context_total, total_ne, total_lp = out

    assert predicted_tokens.shape == (T_DECODER, B)
    assert context_total.shape == (B, T_DECODER, S)
    assert total_ne.shape == (B,) and total_lp.shape == (B,)
    assert bool(jnp.all(jnp.isfinite(context_total)))
    assert bool(jnp.all(jnp.isfinite(total_ne)))
    assert bool(jnp.all(jnp.isfinite(total_lp)))
    assert bool(jnp.all((predicted_tokens >= 0) & (predicted_tokens < V)))
    # attention rows must sum to 1 (exact divide kept for this exported output)
    assert bool(jnp.allclose(jnp.sum(context_total, axis=-1), 1.0, atol=1e-4))
    # log-prob of the argmax token must be <= 0, neg-entropy must be <= 0
    assert bool(jnp.all(total_lp <= 0.0)) and bool(jnp.all(total_ne <= 0.0))

    print("KERNEL_OK")
</pallas_src>

<mosaic_0001>
module attributes {stable_mosaic.version = 11 : i64} {
  func.func @_fused_decoder_kernel(%arg0: memref<1x32xf32, #tpu.memory_space<vmem>>, %arg1: memref<16x32xf32, #tpu.memory_space<vmem>>, %arg2: memref<2x32xf32, #tpu.memory_space<vmem>>, %arg3: memref<2x32xf32, #tpu.memory_space<vmem>>, %arg4: memref<2x8x32xf32, #tpu.memory_space<vmem>>, %arg5: memref<2x1xi32, #tpu.memory_space<vmem>>, %arg6: memref<32x128xf32, #tpu.memory_space<vmem>>, %arg7: memref<32x128xf32, #tpu.memory_space<vmem>>, %arg8: memref<1x128xf32, #tpu.memory_space<vmem>>, %arg9: memref<32x32xf32, #tpu.memory_space<vmem>>, %arg10: memref<1x32xf32, #tpu.memory_space<vmem>>, %arg11: memref<32x32xf32, #tpu.memory_space<vmem>>, %arg12: memref<1x32xf32, #tpu.memory_space<vmem>>, %arg13: memref<32x1xf32, #tpu.memory_space<vmem>>, %arg14: memref<1x1xf32, #tpu.memory_space<vmem>>, %arg15: memref<2x32x16xf32, #tpu.memory_space<vmem>>, %arg16: memref<1x16xf32, #tpu.memory_space<vmem>>, %arg17: memref<2x4xi32, #tpu.memory_space<vmem>>, %arg18: memref<2x4x8xf32, #tpu.memory_space<vmem>>, %arg19: memref<2x2xf32, #tpu.memory_space<vmem>>, %arg20: memref<2x8x32xf32, #tpu.memory_space<vmem>>) attributes {dimension_semantics = [], scalar_prefetch = 0 : i64, scratch_operands = 1 : i64, tpu.core_type = #tpu.core_type<tc>} {
    %c0 = arith.constant 0 : index
    %c0_0 = arith.constant 0 : index
    %c0_1 = arith.constant 0 : index
    %0 = vector.load %arg4[%c0, %c0_0, %c0_1] : memref<2x8x32xf32, #tpu.memory_space<vmem>>, vector<2x8x32xf32>
    %1 = vector.shape_cast %0 : vector<2x8x32xf32> to vector<16x32xf32>
    %c0_2 = arith.constant 0 : index
    %c0_3 = arith.constant 0 : index
    %2 = vector.load %arg9[%c0_2, %c0_3] : memref<32x32xf32, #tpu.memory_space<vmem>>, vector<32x32xf32>
    %cst = arith.constant dense<0.000000e+00> : vector<16x32xf32>
    %3 = tpu.matmul %1, %2, %cst {dimension_numbers = #tpu.dot_dimension_numbers<[1], [0], [0], [1], [0, 0, 1, 1], [], []>} : vector<16x32xf32>, vector<32x32xf32>, vector<16x32xf32> -> vector<16x32xf32>
    %c0_4 = arith.constant 0 : index
    %c0_5 = arith.constant 0 : index
    %4 = vector.load %arg10[%c0_4, %c0_5] : memref<1x32xf32, #tpu.memory_space<vmem>>, vector<1x32xf32>
    %5 = vector.broadcast %4 : vector<1x32xf32> to vector<16x32xf32>
    %6 = arith.addf %3, %5 : vector<16x32xf32>
    %7 = vector.shape_cast %6 : vector<16x32xf32> to vector<2x8x32xf32>
    %c0_6 = arith.constant 0 : index
    %c0_7 = arith.constant 0 : index
    %c0_8 = arith.constant 0 : index
    %8 = vector.load %arg20[%c0_6, %c0_7, %c0_8] : memref<2x8x32xf32, #tpu.memory_space<vmem>>, vector<2x8x32xf32>
    tpu.vector_store %arg20[%c0_6, %c0_7, %c0_8], %7 {strides = array<i32>} : memref<2x8x32xf32, #tpu.memory_space<vmem>>, vector<2x8x32xf32>,
    %c0_9 = arith.constant 0 : index
    %c0_10 = arith.constant 0 : index
    %9 = vector.load %arg2[%c0_9, %c0_10] : memref<2x32xf32, #tpu.memory_space<vmem>>, vector<2x32xf32>
    %c0_11 = arith.constant 0 : index
    %c0_12 = arith.constant 0 : index
    %10 = vector.load %arg7[%c0_11, %c0_12] : memref<32x128xf32, #tpu.memory_space<vmem>>, vector<32x128xf32>
    %cst_13 = arith.constant dense<0.000000e+00> : vector<2x128xf32>
    %11 = tpu.matmul %9, %10, %cst_13 {dimension_numbers = #tpu.dot_dimension_numbers<[1], [0], [0], [1], [0, 0, 1, 1], [], []>} : vector<2x32xf32>, vector<32x128xf32>, vector<2x128xf32> -> vector<2x128xf32>
    %c0_14 = arith.constant 0 : index
    %c0_15 = arith.constant 0 : index
    %12 = vector.load %arg8[%c0_14, %c0_15] : memref<1x128xf32, #tpu.memory_space<vmem>>, vector<1x128xf32>
    %13 = vector.broadcast %12 : vector<1x128xf32> to vector<2x128xf32>
    %14 = arith.addf %11, %13 : vector<2x128xf32>
    %15 = tpu.iota {dimensions = array<i32: 1>} : vector<2x8xi32>
    %c0_16 = arith.constant 0 : index
    %c0_17 = arith.constant 0 : index
    %16 = vector.load %arg5[%c0_16, %c0_17] : memref<2x1xi32, #tpu.memory_space<vmem>>, vector<2x1xi32>
    %17 = vector.broadcast %16 : vector<2x1xi32> to vector<2x8xi32>
    %18 = arith.cmpi sge, %15, %17 : vector<2x8xi32>
    %cst_18 = arith.constant -1.000000e+30 : f32
    %cst_19 = arith.constant 0.000000e+00 : f32
    %19 = vector.broadcast %cst_18 : f32 to vector<2x8xf32>
    %20 = vector.broadcast %cst_19 : f32 to vector<2x8xf32>
    %21 = arith.select %18, %19, %20 : vector<2x8xi1>, vector<2x8xf32>
    %c0_20 = arith.constant 0 : index
    %c0_21 = arith.constant 0 : index
    %22 = vector.load %arg14[%c0_20, %c0_21] : memref<1x1xf32, #tpu.memory_space<vmem>>, vector<1x1xf32>
    %23 = vector.broadcast %22 : vector<1x1xf32> to vector<2x8xf32>
    %24 = arith.addf %21, %23 : vector<2x8xf32>
    %25 = tpu.iota {dimensions = array<i32: 1>} : vector<2x16xi32>
    %c0_22 = arith.constant 0 : index
    %c0_23 = arith.constant 0 : index
    %26 = vector.load %arg0[%c0_22, %c0_23] : memref<1x32xf32, #tpu.memory_space<vmem>>, vector<1x32xf32>
    %27 = vector.shape_cast %26 : vector<1x32xf32> to vector<1x32xf32>
    %28 = vector.broadcast %27 : vector<1x32xf32> to vector<2x32xf32>
    %cst_24 = arith.constant 0.000000e+00 : f32
    %29 = vector.broadcast %cst_24 : f32 to vector<2x1xf32>
    %cst_25 = arith.constant 0.000000e+00 : f32
    %30 = vector.broadcast %cst_25 : f32 to vector<2x1xf32>
    %c0_26 = arith.constant 0 : index
    %c0_27 = arith.constant 0 : index
    %31 = vector.load %arg6[%c0_26, %c0_27] : memref<32x128xf32, #tpu.memory_space<vmem>>, vector<32x128xf32>
    %cst_28 = arith.constant dense<0.000000e+00> : vector<2x128xf32>
    %32 = tpu.matmul %28, %31, %cst_28 {dimension_numbers = #tpu.dot_dimension_numbers<[1], [0], [0], [1], [0, 0, 1, 1], [], []>} : vector<2x32xf32>, vector<32x128xf32>, vector<2x128xf32> -> vector<2x128xf32>
    %33 = arith.addf %32, %14 : vector<2x128xf32>
    %34 = vector.extract_strided_slice %33 {offsets = [0, 0], sizes = [2, 32], strides = [1, 1]} : vector<2x128xf32> to vector<2x32xf32>
    %35 = arith.negf %34 : vector<2x32xf32>
    %36 = math.exp %35 : vector<2x32xf32>
    %cst_29 = arith.constant 1.000000e+00 : f32
    %37 = vector.broadcast %cst_29 : f32 to vector<2x32xf32>
    %38 = arith.addf %37, %36 : vector<2x32xf32>
    %39 = arith.divf %37, %38 : vector<2x32xf32>
    %40 = vector.extract_strided_slice %33 {offsets = [0, 32], sizes = [2, 32], strides = [1, 1]} : vector<2x128xf32> to vector<2x32xf32>
    %41 = arith.negf %40 : vector<2x32xf32>
    %42 = math.exp %41 : vector<2x32xf32>
    %cst_30 = arith.constant 1.000000e+00 : f32
    %43 = vector.broadcast %cst_30 : f32 to vector<2x32xf32>
    %44 = arith.addf %43, %42 : vector<2x32xf32>
    %45 = arith.divf %43, %44 : vector<2x32xf32>
    %46 = vector.extract_strided_slice %33 {offsets = [0, 64], sizes = [2, 32], strides = [1, 1]} : vector<2x128xf32> to vector<2x32xf32>
    %47 = math.tanh %46 : vector<2x32xf32>
    %48 = vector.extract_strided_slice %33 {offsets = [0, 96], sizes = [2, 32], strides = [1, 1]} : vector<2x128xf32> to vector<2x32xf32>
    %49 = arith.negf %48 : vector<2x32xf32>
    %50 = math.exp %49 : vector<2x32xf32>
    %cst_31 = arith.constant 1.000000e+00 : f32
    %51 = vector.broadcast %cst_31 : f32 to vector<2x32xf32>
    %52 = arith.addf %51, %50 : vector<2x32xf32>
    %53 = arith.divf %51, %52 : vector<2x32xf32>
    %c0_32 = arith.constant 0 : index
    %c0_33 = arith.constant 0 : index
    %54 = vector.load %arg3[%c0_32, %c0_33] : memref<2x32xf32, #tpu.memory_space<vmem>>, vector<2x32xf32>
    %55 = arith.mulf %45, %54 : vector<2x32xf32>
    %56 = arith.mulf %39, %47 : vector<2x32xf32>
    %57 = arith.addf %55, %56 : vector<2x32xf32>
    %58 = math.tanh %57 : vector<2x32xf32>
    %59 = arith.mulf %53, %58 : vector<2x32xf32>
    %c0_34 = arith.constant 0 : index
    %c0_35 = arith.constant 0 : index
    %60 = vector.load %arg11[%c0_34, %c0_35] : memref<32x32xf32, #tpu.memory_space<vmem>>, vector<32x32xf32>
    %cst_36 = arith.constant dense<0.000000e+00> : vector<2x32xf32>
    %61 = tpu.matmul %59, %60, %cst_36 {dimension_numbers = #tpu.dot_dimension_numbers<[1], [0], [0], [1], [0, 0, 1, 1], [], []>} : vector<2x32xf32>, vector<32x32xf32>, vector<2x32xf32> -> vector<2x32xf32>
    %c0_37 = arith.constant 0 : index
    %c0_38 = arith.constant 0 : index
    %62 = vector.load %arg12[%c0_37, %c0_38] : memref<1x32xf32, #tpu.memory_space<vmem>>, vector<1x32xf32>
    %63 = vector.broadcast %62 : vector<1x32xf32> to vector<2x32xf32>
    %64 = arith.addf %61, %63 : vector<2x32xf32>
    %c0_39 = arith.constant 0 : index
    %c0_40 = arith.constant 0 : index
    %c0_41 = arith.constant 0 : index
    %65 = vector.load %arg20[%c0_39, %c0_40, %c0_41] : memref<2x8x32xf32, #tpu.memory_space<vmem>>, vector<2x8x32xf32>
    %66 = vector.shape_cast %64 : vector<2x32xf32> to vector<2x1x32xf32>
    %67 = vector.broadcast %66 : vector<2x1x32xf32> to vector<2x8x32xf32>
    %68 = arith.addf %65, %67 : vector<2x8x32xf32>
    %69 = math.tanh %68 : vector<2x8x32xf32>
    %70 = vector.shape_cast %69 : vector<2x8x32xf32> to vector<16x32xf32>
    %c0_42 = arith.constant 0 : index
    %c0_43 = arith.constant 0 : index
    %71 = vector.load %arg13[%c0_42, %c0_43] : memref<32x1xf32, #tpu.memory_space<vmem>>, vector<32x1xf32>
    %cst_44 = arith.constant dense<0.000000e+00> : vector<16x1xf32>
    %72 = tpu.matmul %70, %71, %cst_44 {dimension_numbers = #tpu.dot_dimension_numbers<[1], [0], [0], [1], [0, 0, 1, 1], [], []>} : vector<16x32xf32>, vector<32x1xf32>, vector<16x1xf32> -> vector<16x1xf32>
    %73 = vector.shape_cast %72 : vector<16x1xf32> to vector<2x8xf32>
    %74 = arith.addf %73, %24 : vector<2x8xf32>
    %cst_45 = arith.constant dense<0xFF800000> : vector<2xf32>
    %75 = vector.multi_reduction <maximumf>, %74, %cst_45 [1] : vector<2x8xf32> to vector<2xf32>
    %76 = vector.shape_cast %75 : vector<2xf32> to vector<2x1xf32>
    %77 = vector.broadcast %76 : vector<2x1xf32> to vector<2x8xf32>
    %78 = arith.subf %74, %77 : vector<2x8xf32>
    %79 = math.exp %78 : vector<2x8xf32>
    %cst_46 = arith.constant dense<0.000000e+00> : vector<2xf32>
    %80 = vector.multi_reduction <add>, %79, %cst_46 [1] : vector<2x8xf32> to vector<2xf32>
    %81 = vector.shape_cast %80 : vector<2xf32> to vector<2x1xf32>
    %82 = vector.broadcast %81 : vector<2x1xf32> to vector<2x8xf32>
    %83 = arith.divf %79, %82 : vector<2x8xf32>
    %84 = vector.shape_cast %83 : vector<2x8xf32> to vector<2x1x8xf32>
    %c0_47 = arith.constant 0 : index
    %c0_48 = arith.constant 0 : index
    %c0_49 = arith.constant 0 : index
    %85 = vector.load %arg18[%c0_47, %c0_48, %c0_49] : memref<2x4x8xf32, #tpu.memory_space<vmem>>, vector<2x1x8xf32>
    tpu.vector_store %arg18[%c0_47, %c0_48, %c0_49], %84 {strides = array<i32>} : memref<2x4x8xf32, #tpu.memory_space<vmem>>, vector<2x1x8xf32>,
    %86 = vector.shape_cast %83 : vector<2x8xf32> to vector<2x1x8xf32>
    %c0_50 = arith.constant 0 : index
    %c0_51 = arith.constant 0 : index
    %c0_52 = arith.constant 0 : index
    %87 = vector.load %arg4[%c0_50, %c0_51, %c0_52] : memref<2x8x32xf32, #tpu.memory_space<vmem>>, vector<2x8x32xf32>
    "tpu.trace_start"() <{level = 10 : i32, message = "bqs,bsh->bqh"}> : () -> ()
    %cst_53 = arith.constant dense<0.000000e+00> : vector<2x1x32xf32>
    %88 = tpu.matmul %86, %87, %cst_53 {dimension_numbers = #tpu.dot_dimension_numbers<[2], [1], [1], [2], [0, 0, 0, 1, 1, 2], [0], [0]>} : vector<2x1x8xf32>, vector<2x8x32xf32>, vector<2x1x32xf32> -> vector<2x1x32xf32>
    "tpu.trace_stop"() : () -> ()
    %89 = vector.shape_cast %88 : vector<2x1x32xf32> to vector<2x32xf32>
    %c0_54 = arith.constant 0 : index
    %c0_55 = arith.constant 0 : index
    %c0_56 = arith.constant 0 : index
    %90 = vector.load %arg15[%c0_54, %c0_55, %c0_56] : memref<2x32x16xf32, #tpu.memory_space<vmem>>, vector<1x32x16xf32>
    %91 = vector.shape_cast %90 : vector<1x32x16xf32> to vector<32x16xf32>
    %cst_57 = arith.constant dense<0.000000e+00> : vector<2x16xf32>
    %92 = tpu.matmul %89, %91, %cst_57 {dimension_numbers = #tpu.dot_dimension_numbers<[1], [0], [0], [1], [0, 0, 1, 1], [], []>} : vector<2x32xf32>, vector<32x16xf32>, vector<2x16xf32> -> vector<2x16xf32>
    %c1 = arith.constant 1 : index
    %c0_58 = arith.constant 0 : index
    %c0_59 = arith.constant 0 : index
    %93 = vector.load %arg15[%c1, %c0_58, %c0_59] : memref<2x32x16xf32, #tpu.memory_space<vmem>>, vector<1x32x16xf32>
    %94 = vector.shape_cast %93 : vector<1x32x16xf32> to vector<32x16xf32>
    %cst_60 = arith.constant dense<0.000000e+00> : vector<2x16xf32>
    %95 = tpu.matmul %59, %94, %cst_60 {dimension_numbers = #tpu.dot_dimension_numbers<[1], [0], [0], [1], [0, 0, 1, 1], [], []>} : vector<2x32xf32>, vector<32x16xf32>, vector<2x16xf32> -> vector<2x16xf32>
    %96 = arith.addf %92, %95 : vector<2x16xf32>
    %c0_61 = arith.constant 0 : index
    %c0_62 = arith.constant 0 : index
    %97 = vector.load %arg16[%c0_61, %c0_62] : memref<1x16xf32, #tpu.memory_space<vmem>>, vector<1x16xf32>
    %98 = vector.broadcast %97 : vector<1x16xf32> to vector<2x16xf32>
    %99 = arith.addf %96, %98 : vector<2x16xf32>
    %cst_63 = arith.constant dense<0xFF800000> : vector<2xf32>
    %100 = vector.multi_reduction <maximumf>, %99, %cst_63 [1] : vector<2x16xf32> to vector<2xf32>
    %101 = vector.shape_cast %100 : vector<2xf32> to vector<2x1xf32>
    %102 = vector.broadcast %101 : vector<2x1xf32> to vector<2x16xf32>
    %103 = arith.cmpf oeq, %99, %102 : vector<2x16xf32>
    %c16_i32 = arith.constant 16 : i32
    %104 = vector.broadcast %c16_i32 : i32 to vector<2x16xi32>
    %105 = arith.select %103, %25, %104 : vector<2x16xi1>, vector<2x16xi32>
    %cst_64 = arith.constant dense<2147483647> : vector<2xi32>
    %106 = vector.multi_reduction <minsi>, %105, %cst_64 [1] : vector<2x16xi32> to vector<2xi32>
    %107 = vector.shape_cast %106 : vector<2xi32> to vector<2x1xi32>
    %108 = vector.broadcast %101 : vector<2x1xf32> to vector<2x16xf32>
    %109 = arith.subf %99, %108 : vector<2x16xf32>
    %110 = math.exp %109 : vector<2x16xf32>
    %cst_65 = arith.constant dense<0.000000e+00> : vector<2xf32>
    %111 = vector.multi_reduction <add>, %110, %cst_65 [1] : vector<2x16xf32> to vector<2xf32>
    %112 = vector.shape_cast %111 : vector<2xf32> to vector<2x1xf32>
    %113 = math.log %112 : vector<2x1xf32>
    %114 = arith.subf %30, %113 : vector<2x1xf32>
    %115 = arith.mulf %110, %109 : vector<2x16xf32>
    %cst_66 = arith.constant dense<0.000000e+00> : vector<2xf32>
    %116 = vector.multi_reduction <add>, %115, %cst_66 [1] : vector<2x16xf32> to vector<2xf32>
    %117 = vector.shape_cast %116 : vector<2xf32> to vector<2x1xf32>
    %118 = arith.divf %117, %112 : vector<2x1xf32>
    %119 = arith.subf %118, %113 : vector<2x1xf32>
    %120 = arith.addf %29, %119 : vector<2x1xf32>
    %121 = vector.broadcast %107 : vector<2x1xi32> to vector<2x16xi32>
    %122 = arith.cmpi eq, %25, %121 : vector<2x16xi32>
    %123 = arith.extui %122 : vector<2x16xi1> to vector<2x16xi32>
    %124 = arith.sitofp %123 : vector<2x16xi32> to vector<2x16xf32>
    %c0_67 = arith.constant 0 : index
    %c0_68 = arith.constant 0 : index
    %125 = vector.load %arg1[%c0_67, %c0_68] : memref<16x32xf32, #tpu.memory_space<vmem>>, vector<16x32xf32>
    %cst_69 = arith.constant dense<0.000000e+00> : vector<2x32xf32>
    %126 = tpu.matmul %124, %125, %cst_69 {dimension_numbers = #tpu.dot_dimension_numbers<[1], [0], [0], [1], [0, 0, 1, 1], [], []>} : vector<2x16xf32>, vector<16x32xf32>, vector<2x32xf32> -> vector<2x32xf32>
    %c0_70 = arith.constant 0 : index
    %c0_71 = arith.constant 0 : index
    %127 = vector.load %arg6[%c0_70, %c0_71] : memref<32x128xf32, #tpu.memory_space<vmem>>, vector<32x128xf32>
    %cst_72 = arith.constant dense<0.000000e+00> : vector<2x128xf32>
    %128 = tpu.matmul %126, %127, %cst_72 {dimension_numbers = #tpu.dot_dimension_numbers<[1], [0], [0], [1], [0, 0, 1, 1], [], []>} : vector<2x32xf32>, vector<32x128xf32>, vector<2x128xf32> -> vector<2x128xf32>
    %129 = arith.addf %128, %14 : vector<2x128xf32>
    %130 = vector.extract_strided_slice %129 {offsets = [0, 0], sizes = [2, 32], strides = [1, 1]} : vector<2x128xf32> to vector<2x32xf32>
    %131 = arith.negf %130 : vector<2x32xf32>
    %132 = math.exp %131 : vector<2x32xf32>
    %cst_73 = arith.constant 1.000000e+00 : f32
    %133 = vector.broadcast %cst_73 : f32 to vector<2x32xf32>
    %134 = arith.addf %133, %132 : vector<2x32xf32>
    %135 = arith.divf %133, %134 : vector<2x32xf32>
    %136 = vector.extract_strided_slice %129 {offsets = [0, 32], sizes = [2, 32], strides = [1, 1]} : vector<2x128xf32> to vector<2x32xf32>
    %137 = arith.negf %136 : vector<2x32xf32>
    %138 = math.exp %137 : vector<2x32xf32>
    %cst_74 = arith.constant 1.000000e+00 : f32
    %139 = vector.broadcast %cst_74 : f32 to vector<2x32xf32>
    %140 = arith.addf %139, %138 : vector<2x32xf32>
    %141 = arith.divf %139, %140 : vector<2x32xf32>
    %142 = vector.extract_strided_slice %129 {offsets = [0, 64], sizes = [2, 32], strides = [1, 1]} : vector<2x128xf32> to vector<2x32xf32>
    %143 = math.tanh %142 : vector<2x32xf32>
    %144 = vector.extract_strided_slice %129 {offsets = [0, 96], sizes = [2, 32], strides = [1, 1]} : vector<2x128xf32> to vector<2x32xf32>
    %145 = arith.negf %144 : vector<2x32xf32>
    %146 = math.exp %145 : vector<2x32xf32>
    %cst_75 = arith.constant 1.000000e+00 : f32
    %147 = vector.broadcast %cst_75 : f32 to vector<2x32xf32>
    %148 = arith.addf %147, %146 : vector<2x32xf32>
    %149 = arith.divf %147, %148 : vector<2x32xf32>
    %c0_76 = arith.constant 0 : index
    %c0_77 = arith.constant 0 : index
    %150 = vector.load %arg3[%c0_76, %c0_77] : memref<2x32xf32, #tpu.memory_space<vmem>>, vector<2x32xf32>
    %151 = arith.mulf %141, %150 : vector<2x32xf32>
    %152 = arith.mulf %135, %143 : vector<2x32xf32>
    %153 = arith.addf %151, %152 : vector<2x32xf32>
    %154 = math.tanh %153 : vector<2x32xf32>
    %155 = arith.mulf %149, %154 : vector<2x32xf32>
    %c0_78 = arith.constant 0 : index
    %c0_79 = arith.constant 0 : index
    %156 = vector.load %arg11[%c0_78, %c0_79] : memref<32x32xf32, #tpu.memory_space<vmem>>, vector<32x32xf32>
    %cst_80 = arith.constant dense<0.000000e+00> : vector<2x32xf32>
    %157 = tpu.matmul %155, %156, %cst_80 {dimension_numbers = #tpu.dot_dimension_numbers<[1], [0], [0], [1], [0, 0, 1, 1], [], []>} : vector<2x32xf32>, vector<32x32xf32>, vector<2x32xf32> -> vector<2x32xf32>
    %c0_81 = arith.constant 0 : index
    %c0_82 = arith.constant 0 : index
    %158 = vector.load %arg12[%c0_81, %c0_82] : memref<1x32xf32, #tpu.memory_space<vmem>>, vector<1x32xf32>
    %159 = vector.broadcast %158 : vector<1x32xf32> to vector<2x32xf32>
    %160 = arith.addf %157, %159 : vector<2x32xf32>
    %c0_83 = arith.constant 0 : index
    %c0_84 = arith.constant 0 : index
    %c0_85 = arith.constant 0 : index
    %161 = vector.load %arg20[%c0_83, %c0_84, %c0_85] : memref<2x8x32xf32, #tpu.memory_space<vmem>>, vector<2x8x32xf32>
    %162 = vector.shape_cast %160 : vector<2x32xf32> to vector<2x1x32xf32>
    %163 = vector.broadcast %162 : vector<2x1x32xf32> to vector<2x8x32xf32>
    %164 = arith.addf %161, %163 : vector<2x8x32xf32>
    %165 = math.tanh %164 : vector<2x8x32xf32>
    %166 = vector.shape_cast %165 : vector<2x8x32xf32> to vector<16x32xf32>
    %c0_86 = arith.constant 0 : index
    %c0_87 = arith.constant 0 : index
    %167 = vector.load %arg13[%c0_86, %c0_87] : memref<32x1xf32, #tpu.memory_space<vmem>>, vector<32x1xf32>
    %cst_88 = arith.constant dense<0.000000e+00> : vector<16x1xf32>
    %168 = tpu.matmul %166, %167, %cst_88 {dimension_numbers = #tpu.dot_dimension_numbers<[1], [0], [0], [1], [0, 0, 1, 1], [], []>} : vector<16x32xf32>, vector<32x1xf32>, vector<16x1xf32> -> vector<16x1xf32>
    %169 = vector.shape_cast %168 : vector<16x1xf32> to vector<2x8xf32>
    %170 = arith.addf %169, %24 : vector<2x8xf32>
    %cst_89 = arith.constant dense<0xFF800000> : vector<2xf32>
    %171 = vector.multi_reduction <maximumf>, %170, %cst_89 [1] : vector<2x8xf32> to vector<2xf32>
    %172 = vector.shape_cast %171 : vector<2xf32> to vector<2x1xf32>
    %173 = vector.broadcast %172 : vector<2x1xf32> to vector<2x8xf32>
    %174 = arith.subf %170, %173 : vector<2x8xf32>
    %175 = math.exp %174 : vector<2x8xf32>
    %cst_90 = arith.constant dense<0.000000e+00> : vector<2xf32>
    %176 = vector.multi_reduction <add>, %175, %cst_90 [1] : vector<2x8xf32> to vector<2xf32>
    %177 = vector.shape_cast %176 : vector<2xf32> to vector<2x1xf32>
    %178 = vector.broadcast %177 : vector<2x1xf32> to vector<2x8xf32>
    %179 = arith.divf %175, %178 : vector<2x8xf32>
    %180 = vector.shape_cast %179 : vector<2x8xf32> to vector<2x1x8xf32>
    %c0_91 = arith.constant 0 : index
    %c1_92 = arith.constant 1 : index
    %c0_93 = arith.constant 0 : index
    %181 = vector.load %arg18[%c0_91, %c1_92, %c0_93] : memref<2x4x8xf32, #tpu.memory_space<vmem>>, vector<2x1x8xf32>
    tpu.vector_store %arg18[%c0_91, %c1_92, %c0_93], %180 {strides = array<i32>} : memref<2x4x8xf32, #tpu.memory_space<vmem>>, vector<2x1x8xf32>,
    %182 = vector.shape_cast %179 : vector<2x8xf32> to vector<2x1x8xf32>
    %c0_94 = arith.constant 0 : index
    %c0_95 = arith.constant 0 : index
    %c0_96 = arith.constant 0 : index
    %183 = vector.load %arg4[%c0_94, %c0_95, %c0_96] : memref<2x8x32xf32, #tpu.memory_space<vmem>>, vector<2x8x32xf32>
    "tpu.trace_start"() <{level = 10 : i32, message = "bqs,bsh->bqh"}> : () -> ()
    %cst_97 = arith.constant dense<0.000000e+00> : vector<2x1x32xf32>
    %184 = tpu.matmul %182, %183, %cst_97 {dimension_numbers = #tpu.dot_dimension_numbers<[2], [1], [1], [2], [0, 0, 0, 1, 1, 2], [0], [0]>} : vector<2x1x8xf32>, vector<2x8x32xf32>, vector<2x1x32xf32> -> vector<2x1x32xf32>
    "tpu.trace_stop"() : () -> ()
    %185 = vector.shape_cast %184 : vector<2x1x32xf32> to vector<2x32xf32>
    %c0_98 = arith.constant 0 : index
    %c0_99 = arith.constant 0 : index
    %c0_100 = arith.constant 0 : index
    %186 = vector.load %arg15[%c0_98, %c0_99, %c0_100] : memref<2x32x16xf32, #tpu.memory_space<vmem>>, vector<1x32x16xf32>
    %187 = vector.shape_cast %186 : vector<1x32x16xf32> to vector<32x16xf32>
    %cst_101 = arith.constant dense<0.000000e+00> : vector<2x16xf32>
    %188 = tpu.matmul %185, %187, %cst_101 {dimension_numbers = #tpu.dot_dimension_numbers<[1], [0], [0], [1], [0, 0, 1, 1], [], []>} : vector<2x32xf32>, vector<32x16xf32>, vector<2x16xf32> -> vector<2x16xf32>
    %c1_102 = arith.constant 1 : index
    %c0_103 = arith.constant 0 : index
    %c0_104 = arith.constant 0 : index
    %189 = vector.load %arg15[%c1_102, %c0_103, %c0_104] : memref<2x32x16xf32, #tpu.memory_space<vmem>>, vector<1x32x16xf32>
    %190 = vector.shape_cast %189 : vector<1x32x16xf32> to vector<32x16xf32>
    %cst_105 = arith.constant dense<0.000000e+00> : vector<2x16xf32>
    %191 = tpu.matmul %155, %190, %cst_105 {dimension_numbers = #tpu.dot_dimension_numbers<[1], [0], [0], [1], [0, 0, 1, 1], [], []>} : vector<2x32xf32>, vector<32x16xf32>, vector<2x16xf32> -> vector<2x16xf32>
    %192 = arith.addf %188, %191 : vector<2x16xf32>
    %c0_106 = arith.constant 0 : index
    %c0_107 = arith.constant 0 : index
    %193 = vector.load %arg16[%c0_106, %c0_107] : memref<1x16xf32, #tpu.memory_space<vmem>>, vector<1x16xf32>
    %194 = vector.broadcast %193 : vector<1x16xf32> to vector<2x16xf32>
    %195 = arith.addf %192, %194 : vector<2x16xf32>
    %cst_108 = arith.constant dense<0xFF800000> : vector<2xf32>
    %196 = vector.multi_reduction <maximumf>, %195, %cst_108 [1] : vector<2x16xf32> to vector<2xf32>
    %197 = vector.shape_cast %196 : vector<2xf32> to vector<2x1xf32>
    %198 = vector.broadcast %197 : vector<2x1xf32> to vector<2x16xf32>
    %199 = arith.cmpf oeq, %195, %198 : vector<2x16xf32>
    %c16_i32_109 = arith.constant 16 : i32
    %200 = vector.broadcast %c16_i32_109 : i32 to vector<2x16xi32>
    %201 = arith.select %199, %25, %200 : vector<2x16xi1>, vector<2x16xi32>
    %cst_110 = arith.constant dense<2147483647> : vector<2xi32>
    %202 = vector.multi_reduction <minsi>, %201, %cst_110 [1] : vector<2x16xi32> to vector<2xi32>
    %203 = vector.shape_cast %202 : vector<2xi32> to vector<2x1xi32>
    %204 = vector.broadcast %197 : vector<2x1xf32> to vector<2x16xf32>
    %205 = arith.subf %195, %204 : vector<2x16xf32>
    %206 = math.exp %205 : vector<2x16xf32>
    %cst_111 = arith.constant dense<0.000000e+00> : vector<2xf32>
    %207 = vector.multi_reduction <add>, %206, %cst_111 [1] : vector<2x16xf32> to vector<2xf32>
    %208 = vector.shape_cast %207 : vector<2xf32> to vector<2x1xf32>
    %209 = math.log %208 : vector<2x1xf32>
    %210 = arith.subf %114, %209 : vector<2x1xf32>
    %211 = arith.mulf %206, %205 : vector<2x16xf32>
    %cst_112 = arith.constant dense<0.000000e+00> : vector<2xf32>
    %212 = vector.multi_reduction <add>, %211, %cst_112 [1] : vector<2x16xf32> to vector<2xf32>
    %213 = vector.shape_cast %212 : vector<2xf32> to vector<2x1xf32>
    %214 = arith.divf %213, %208 : vector<2x1xf32>
    %215 = arith.subf %214, %209 : vector<2x1xf32>
    %216 = arith.addf %120, %215 : vector<2x1xf32>
    %217 = vector.broadcast %203 : vector<2x1xi32> to vector<2x16xi32>
    %218 = arith.cmpi eq, %25, %217 : vector<2x16xi32>
    %219 = arith.extui %218 : vector<2x16xi1> to vector<2x16xi32>
    %220 = arith.sitofp %219 : vector<2x16xi32> to vector<2x16xf32>
    %c0_113 = arith.constant 0 : index
    %c0_114 = arith.constant 0 : index
    %221 = vector.load %arg1[%c0_113, %c0_114] : memref<16x32xf32, #tpu.memory_space<vmem>>, vector<16x32xf32>
    %cst_115 = arith.constant dense<0.000000e+00> : vector<2x32xf32>
    %222 = tpu.matmul %220, %221, %cst_115 {dimension_numbers = #tpu.dot_dimension_numbers<[1], [0], [0], [1], [0, 0, 1, 1], [], []>} : vector<2x16xf32>, vector<16x32xf32>, vector<2x32xf32> -> vector<2x32xf32>
    %c0_116 = arith.constant 0 : index
    %c0_117 = arith.constant 0 : index
    %223 = vector.load %arg6[%c0_116, %c0_117] : memref<32x128xf32, #tpu.memory_space<vmem>>, vector<32x128xf32>
    %cst_118 = arith.constant dense<0.000000e+00> : vector<2x128xf32>
    %224 = tpu.matmul %222, %223, %cst_118 {dimension_numbers = #tpu.dot_dimension_numbers<[1], [0], [0], [1], [0, 0, 1, 1], [], []>} : vector<2x32xf32>, vector<32x128xf32>, vector<2x128xf32> -> vector<2x128xf32>
    %225 = arith.addf %224, %14 : vector<2x128xf32>
    %226 = vector.extract_strided_slice %225 {offsets = [0, 0], sizes = [2, 32], strides = [1, 1]} : vector<2x128xf32> to vector<2x32xf32>
    %227 = arith.negf %226 : vector<2x32xf32>
    %228 = math.exp %227 : vector<2x32xf32>
    %cst_119 = arith.constant 1.000000e+00 : f32
    %229 = vector.broadcast %cst_119 : f32 to vector<2x32xf32>
    %230 = arith.addf %229, %228 : vector<2x32xf32>
    %231 = arith.divf %229, %230 : vector<2x32xf32>
    %232 = vector.extract_strided_slice %225 {offsets = [0, 32], sizes = [2, 32], strides = [1, 1]} : vector<2x128xf32> to vector<2x32xf32>
    %233 = arith.negf %232 : vector<2x32xf32>
    %234 = math.exp %233 : vector<2x32xf32>
    %cst_120 = arith.constant 1.000000e+00 : f32
    %235 = vector.broadcast %cst_120 : f32 to vector<2x32xf32>
    %236 = arith.addf %235, %234 : vector<2x32xf32>
    %237 = arith.divf %235, %236 : vector<2x32xf32>
    %238 = vector.extract_strided_slice %225 {offsets = [0, 64], sizes = [2, 32], strides = [1, 1]} : vector<2x128xf32> to vector<2x32xf32>
    %239 = math.tanh %238 : vector<2x32xf32>
    %240 = vector.extract_strided_slice %225 {offsets = [0, 96], sizes = [2, 32], strides = [1, 1]} : vector<2x128xf32> to vector<2x32xf32>
    %241 = arith.negf %240 : vector<2x32xf32>
    %242 = math.exp %241 : vector<2x32xf32>
    %cst_121 = arith.constant 1.000000e+00 : f32
    %243 = vector.broadcast %cst_121 : f32 to vector<2x32xf32>
    %244 = arith.addf %243, %242 : vector<2x32xf32>
    %245 = arith.divf %243, %244 : vector<2x32xf32>
    %c0_122 = arith.constant 0 : index
    %c0_123 = arith.constant 0 : index
    %246 = vector.load %arg3[%c0_122, %c0_123] : memref<2x32xf32, #tpu.memory_space<vmem>>, vector<2x32xf32>
    %247 = arith.mulf %237, %246 : vector<2x32xf32>
    %248 = arith.mulf %231, %239 : vector<2x32xf32>
    %249 = arith.addf %247, %248 : vector<2x32xf32>
    %250 = math.tanh %249 : vector<2x32xf32>
    %251 = arith.mulf %245, %250 : vector<2x32xf32>
    %c0_124 = arith.constant 0 : index
    %c0_125 = arith.constant 0 : index
    %252 = vector.load %arg11[%c0_124, %c0_125] : memref<32x32xf32, #tpu.memory_space<vmem>>, vector<32x32xf32>
    %cst_126 = arith.constant dense<0.000000e+00> : vector<2x32xf32>
    %253 = tpu.matmul %251, %252, %cst_126 {dimension_numbers = #tpu.dot_dimension_numbers<[1], [0], [0], [1], [0, 0, 1, 1], [], []>} : vector<2x32xf32>, vector<32x32xf32>, vector<2x32xf32> -> vector<2x32xf32>
    %c0_127 = arith.constant 0 : index
    %c0_128 = arith.constant 0 : index
    %254 = vector.load %arg12[%c0_127, %c0_128] : memref<1x32xf32, #tpu.memory_space<vmem>>, vector<1x32xf32>
    %255 = vector.broadcast %254 : vector<1x32xf32> to vector<2x32xf32>
    %256 = arith.addf %253, %255 : vector<2x32xf32>
    %c0_129 = arith.constant 0 : index
    %c0_130 = arith.constant 0 : index
    %c0_131 = arith.constant 0 : index
    %257 = vector.load %arg20[%c0_129, %c0_130, %c0_131] : memref<2x8x32xf32, #tpu.memory_space<vmem>>, vector<2x8x32xf32>
    %258 = vector.shape_cast %256 : vector<2x32xf32> to vector<2x1x32xf32>
    %259 = vector.broadcast %258 : vector<2x1x32xf32> to vector<2x8x32xf32>
    %260 = arith.addf %257, %259 : vector<2x8x32xf32>
    %261 = math.tanh %260 : vector<2x8x32xf32>
    %262 = vector.shape_cast %261 : vector<2x8x32xf32> to vector<16x32xf32>
    %c0_132 = arith.constant 0 : index
    %c0_133 = arith.constant 0 : index
    %263 = vector.load %arg13[%c0_132, %c0_133] : memref<32x1xf32, #tpu.memory_space<vmem>>, vector<32x1xf32>
    %cst_134 = arith.constant dense<0.000000e+00> : vector<16x1xf32>
    %264 = tpu.matmul %262, %263, %cst_134 {dimension_numbers = #tpu.dot_dimension_numbers<[1], [0], [0], [1], [0, 0, 1, 1], [], []>} : vector<16x32xf32>, vector<32x1xf32>, vector<16x1xf32> -> vector<16x1xf32>
    %265 = vector.shape_cast %264 : vector<16x1xf32> to vector<2x8xf32>
    %266 = arith.addf %265, %24 : vector<2x8xf32>
    %cst_135 = arith.constant dense<0xFF800000> : vector<2xf32>
    %267 = vector.multi_reduction <maximumf>, %266, %cst_135 [1] : vector<2x8xf32> to vector<2xf32>
    %268 = vector.shape_cast %267 : vector<2xf32> to vector<2x1xf32>
    %269 = vector.broadcast %268 : vector<2x1xf32> to vector<2x8xf32>
    %270 = arith.subf %266, %269 : vector<2x8xf32>
    %271 = math.exp %270 : vector<2x8xf32>
    %cst_136 = arith.constant dense<0.000000e+00> : vector<2xf32>
    %272 = vector.multi_reduction <add>, %271, %cst_136 [1] : vector<2x8xf32> to vector<2xf32>
    %273 = vector.shape_cast %272 : vector<2xf32> to vector<2x1xf32>
    %274 = vector.broadcast %273 : vector<2x1xf32> to vector<2x8xf32>
    %275 = arith.divf %271, %274 : vector<2x8xf32>
    %276 = vector.shape_cast %275 : vector<2x8xf32> to vector<2x1x8xf32>
    %c0_137 = arith.constant 0 : index
    %c2 = arith.constant 2 : index
    %c0_138 = arith.constant 0 : index
    %277 = vector.load %arg18[%c0_137, %c2, %c0_138] : memref<2x4x8xf32, #tpu.memory_space<vmem>>, vector<2x1x8xf32>
    tpu.vector_store %arg18[%c0_137, %c2, %c0_138], %276 {strides = array<i32>} : memref<2x4x8xf32, #tpu.memory_space<vmem>>, vector<2x1x8xf32>,
    %278 = vector.shape_cast %275 : vector<2x8xf32> to vector<2x1x8xf32>
    %c0_139 = arith.constant 0 : index
    %c0_140 = arith.constant 0 : index
    %c0_141 = arith.constant 0 : index
    %279 = vector.load %arg4[%c0_139, %c0_140, %c0_141] : memref<2x8x32xf32, #tpu.memory_space<vmem>>, vector<2x8x32xf32>
    "tpu.trace_start"() <{level = 10 : i32, message = "bqs,bsh->bqh"}> : () -> ()
    %cst_142 = arith.constant dense<0.000000e+00> : vector<2x1x32xf32>
    %280 = tpu.matmul %278, %279, %cst_142 {dimension_numbers = #tpu.dot_dimension_numbers<[2], [1], [1], [2], [0, 0, 0, 1, 1, 2], [0], [0]>} : vector<2x1x8xf32>, vector<2x8x32xf32>, vector<2x1x32xf32> -> vector<2x1x32xf32>
    "tpu.trace_stop"() : () -> ()
    %281 = vector.shape_cast %280 : vector<2x1x32xf32> to vector<2x32xf32>
    %c0_143 = arith.constant 0 : index
    %c0_144 = arith.constant 0 : index
    %c0_145 = arith.constant 0 : index
    %282 = vector.load %arg15[%c0_143, %c0_144, %c0_145] : memref<2x32x16xf32, #tpu.memory_space<vmem>>, vector<1x32x16xf32>
    %283 = vector.shape_cast %282 : vector<1x32x16xf32> to vector<32x16xf32>
    %cst_146 = arith.constant dense<0.000000e+00> : vector<2x16xf32>
    %284 = tpu.matmul %281, %283, %cst_146 {dimension_numbers = #tpu.dot_dimension_numbers<[1], [0], [0], [1], [0, 0, 1, 1], [], []>} : vector<2x32xf32>, vector<32x16xf32>, vector<2x16xf32> -> vector<2x16xf32>
    %c1_147 = arith.constant 1 : index
    %c0_148 = arith.constant 0 : index
    %c0_149 = arith.constant 0 : index
    %285 = vector.load %arg15[%c1_147, %c0_148, %c0_149] : memref<2x32x16xf32, #tpu.memory_space<vmem>>, vector<1x32x16xf32>
    %286 = vector.shape_cast %285 : vector<1x32x16xf32> to vector<32x16xf32>
    %cst_150 = arith.constant dense<0.000000e+00> : vector<2x16xf32>
    %287 = tpu.matmul %251, %286, %cst_150 {dimension_numbers = #tpu.dot_dimension_numbers<[1], [0], [0], [1], [0, 0, 1, 1], [], []>} : vector<2x32xf32>, vector<32x16xf32>, vector<2x16xf32> -> vector<2x16xf32>
    %288 = arith.addf %284, %287 : vector<2x16xf32>
    %c0_151 = arith.constant 0 : index
    %c0_152 = arith.constant 0 : index
    %289 = vector.load %arg16[%c0_151, %c0_152] : memref<1x16xf32, #tpu.memory_space<vmem>>, vector<1x16xf32>
    %290 = vector.broadcast %289 : vector<1x16xf32> to vector<2x16xf32>
    %291 = arith.addf %288, %290 : vector<2x16xf32>
    %cst_153 = arith.constant dense<0xFF800000> : vector<2xf32>
    %292 = vector.multi_reduction <maximumf>, %291, %cst_153 [1] : vector<2x16xf32> to vector<2xf32>
    %293 = vector.shape_cast %292 : vector<2xf32> to vector<2x1xf32>
    %294 = vector.broadcast %293 : vector<2x1xf32> to vector<2x16xf32>
    %295 = arith.cmpf oeq, %291, %294 : vector<2x16xf32>
    %c16_i32_154 = arith.constant 16 : i32
    %296 = vector.broadcast %c16_i32_154 : i32 to vector<2x16xi32>
    %297 = arith.select %295, %25, %296 : vector<2x16xi1>, vector<2x16xi32>
    %cst_155 = arith.constant dense<2147483647> : vector<2xi32>
    %298 = vector.multi_reduction <minsi>, %297, %cst_155 [1] : vector<2x16xi32> to vector<2xi32>
    %299 = vector.shape_cast %298 : vector<2xi32> to vector<2x1xi32>
    %300 = vector.broadcast %293 : vector<2x1xf32> to vector<2x16xf32>
    %301 = arith.subf %291, %300 : vector<2x16xf32>
    %302 = math.exp %301 : vector<2x16xf32>
    %cst_156 = arith.constant dense<0.000000e+00> : vector<2xf32>
    %303 = vector.multi_reduction <add>, %302, %cst_156 [1] : vector<2x16xf32> to vector<2xf32>
    %304 = vector.shape_cast %303 : vector<2xf32> to vector<2x1xf32>
    %305 = math.log %304 : vector<2x1xf32>
    %306 = arith.subf %210, %305 : vector<2x1xf32>
    %307 = arith.mulf %302, %301 : vector<2x16xf32>
    %cst_157 = arith.constant dense<0.000000e+00> : vector<2xf32>
    %308 = vector.multi_reduction <add>, %307, %cst_157 [1] : vector<2x16xf32> to vector<2xf32>
    %309 = vector.shape_cast %308 : vector<2xf32> to vector<2x1xf32>
    %310 = arith.divf %309, %304 : vector<2x1xf32>
    %311 = arith.subf %310, %305 : vector<2x1xf32>
    %312 = arith.addf %216, %311 : vector<2x1xf32>
    %313 = vector.broadcast %299 : vector<2x1xi32> to vector<2x16xi32>
    %314 = arith.cmpi eq, %25, %313 : vector<2x16xi32>
    %315 = arith.extui %314 : vector<2x16xi1> to vector<2x16xi32>
    %316 = arith.sitofp %315 : vector<2x16xi32> to vector<2x16xf32>
    %c0_158 = arith.constant 0 : index
    %c0_159 = arith.constant 0 : index
    %317 = vector.load %arg1[%c0_158, %c0_159] : memref<16x32xf32, #tpu.memory_space<vmem>>, vector<16x32xf32>
    %cst_160 = arith.constant dense<0.000000e+00> : vector<2x32xf32>
    %318 = tpu.matmul %316, %317, %cst_160 {dimension_numbers = #tpu.dot_dimension_numbers<[1], [0], [0], [1], [0, 0, 1, 1], [], []>} : vector<2x16xf32>, vector<16x32xf32>, vector<2x32xf32> -> vector<2x32xf32>
    %c0_161 = arith.constant 0 : index
    %c0_162 = arith.constant 0 : index
    %319 = vector.load %arg6[%c0_161, %c0_162] : memref<32x128xf32, #tpu.memory_space<vmem>>, vector<32x128xf32>
    %cst_163 = arith.constant dense<0.000000e+00> : vector<2x128xf32>
    %320 = tpu.matmul %318, %319, %cst_163 {dimension_numbers = #tpu.dot_dimension_numbers<[1], [0], [0], [1], [0, 0, 1, 1], [], []>} : vector<2x32xf32>, vector<32x128xf32>, vector<2x128xf32> -> vector<2x128xf32>
    %321 = arith.addf %320, %14 : vector<2x128xf32>
    %322 = vector.extract_strided_slice %321 {offsets = [0, 0], sizes = [2, 32], strides = [1, 1]} : vector<2x128xf32> to vector<2x32xf32>
    %323 = arith.negf %322 : vector<2x32xf32>
    %324 = math.exp %323 : vector<2x32xf32>
    %cst_164 = arith.constant 1.000000e+00 : f32
    %325 = vector.broadcast %cst_164 : f32 to vector<2x32xf32>
    %326 = arith.addf %325, %324 : vector<2x32xf32>
    %327 = arith.divf %325, %326 : vector<2x32xf32>
    %328 = vector.extract_strided_slice %321 {offsets = [0, 32], sizes = [2, 32], strides = [1, 1]} : vector<2x128xf32> to vector<2x32xf32>
    %329 = arith.negf %328 : vector<2x32xf32>
    %330 = math.exp %329 : vector<2x32xf32>
    %cst_165 = arith.constant 1.000000e+00 : f32
    %331 = vector.broadcast %cst_165 : f32 to vector<2x32xf32>
    %332 = arith.addf %331, %330 : vector<2x32xf32>
    %333 = arith.divf %331, %332 : vector<2x32xf32>
    %334 = vector.extract_strided_slice %321 {offsets = [0, 64], sizes = [2, 32], strides = [1, 1]} : vector<2x128xf32> to vector<2x32xf32>
    %335 = math.tanh %334 : vector<2x32xf32>
    %336 = vector.extract_strided_slice %321 {offsets = [0, 96], sizes = [2, 32], strides = [1, 1]} : vector<2x128xf32> to vector<2x32xf32>
    %337 = arith.negf %336 : vector<2x32xf32>
    %338 = math.exp %337 : vector<2x32xf32>
    %cst_166 = arith.constant 1.000000e+00 : f32
    %339 = vector.broadcast %cst_166 : f32 to vector<2x32xf32>
    %340 = arith.addf %339, %338 : vector<2x32xf32>
    %341 = arith.divf %339, %340 : vector<2x32xf32>
    %c0_167 = arith.constant 0 : index
    %c0_168 = arith.constant 0 : index
    %342 = vector.load %arg3[%c0_167, %c0_168] : memref<2x32xf32, #tpu.memory_space<vmem>>, vector<2x32xf32>
    %343 = arith.mulf %333, %342 : vector<2x32xf32>
    %344 = arith.mulf %327, %335 : vector<2x32xf32>
    %345 = arith.addf %343, %344 : vector<2x32xf32>
    %346 = math.tanh %345 : vector<2x32xf32>
    %347 = arith.mulf %341, %346 : vector<2x32xf32>
    %c0_169 = arith.constant 0 : index
    %c0_170 = arith.constant 0 : index
    %348 = vector.load %arg11[%c0_169, %c0_170] : memref<32x32xf32, #tpu.memory_space<vmem>>, vector<32x32xf32>
    %cst_171 = arith.constant dense<0.000000e+00> : vector<2x32xf32>
    %349 = tpu.matmul %347, %348, %cst_171 {dimension_numbers = #tpu.dot_dimension_numbers<[1], [0], [0], [1], [0, 0, 1, 1], [], []>} : vector<2x32xf32>, vector<32x32xf32>, vector<2x32xf32> -> vector<2x32xf32>
    %c0_172 = arith.constant 0 : index
    %c0_173 = arith.constant 0 : index
    %350 = vector.load %arg12[%c0_172, %c0_173] : memref<1x32xf32, #tpu.memory_space<vmem>>, vector<1x32xf32>
    %351 = vector.broadcast %350 : vector<1x32xf32> to vector<2x32xf32>
    %352 = arith.addf %349, %351 : vector<2x32xf32>
    %c0_174 = arith.constant 0 : index
    %c0_175 = arith.constant 0 : index
    %c0_176 = arith.constant 0 : index
    %353 = vector.load %arg20[%c0_174, %c0_175, %c0_176] : memref<2x8x32xf32, #tpu.memory_space<vmem>>, vector<2x8x32xf32>
    %354 = vector.shape_cast %352 : vector<2x32xf32> to vector<2x1x32xf32>
    %355 = vector.broadcast %354 : vector<2x1x32xf32> to vector<2x8x32xf32>
    %356 = arith.addf %353, %355 : vector<2x8x32xf32>
    %357 = math.tanh %356 : vector<2x8x32xf32>
    %358 = vector.shape_cast %357 : vector<2x8x32xf32> to vector<16x32xf32>
    %c0_177 = arith.constant 0 : index
    %c0_178 = arith.constant 0 : index
    %359 = vector.load %arg13[%c0_177, %c0_178] : memref<32x1xf32, #tpu.memory_space<vmem>>, vector<32x1xf32>
    %cst_179 = arith.constant dense<0.000000e+00> : vector<16x1xf32>
    %360 = tpu.matmul %358, %359, %cst_179 {dimension_numbers = #tpu.dot_dimension_numbers<[1], [0], [0], [1], [0, 0, 1, 1], [], []>} : vector<16x32xf32>, vector<32x1xf32>, vector<16x1xf32> -> vector<16x1xf32>
    %361 = vector.shape_cast %360 : vector<16x1xf32> to vector<2x8xf32>
    %362 = arith.addf %361, %24 : vector<2x8xf32>
    %cst_180 = arith.constant dense<0xFF800000> : vector<2xf32>
    %363 = vector.multi_reduction <maximumf>, %362, %cst_180 [1] : vector<2x8xf32> to vector<2xf32>
    %364 = vector.shape_cast %363 : vector<2xf32> to vector<2x1xf32>
    %365 = vector.broadcast %364 : vector<2x1xf32> to vector<2x8xf32>
    %366 = arith.subf %362, %365 : vector<2x8xf32>
    %367 = math.exp %366 : vector<2x8xf32>
    %cst_181 = arith.constant dense<0.000000e+00> : vector<2xf32>
    %368 = vector.multi_reduction <add>, %367, %cst_181 [1] : vector<2x8xf32> to vector<2xf32>
    %369 = vector.shape_cast %368 : vector<2xf32> to vector<2x1xf32>
    %370 = vector.broadcast %369 : vector<2x1xf32> to vector<2x8xf32>
    %371 = arith.divf %367, %370 : vector<2x8xf32>
    %372 = vector.shape_cast %371 : vector<2x8xf32> to vector<2x1x8xf32>
    %c0_182 = arith.constant 0 : index
    %c3 = arith.constant 3 : index
    %c0_183 = arith.constant 0 : index
    %373 = vector.load %arg18[%c0_182, %c3, %c0_183] : memref<2x4x8xf32, #tpu.memory_space<vmem>>, vector<2x1x8xf32>
    tpu.vector_store %arg18[%c0_182, %c3, %c0_183], %372 {strides = array<i32>} : memref<2x4x8xf32, #tpu.memory_space<vmem>>, vector<2x1x8xf32>,
    %374 = vector.shape_cast %371 : vector<2x8xf32> to vector<2x1x8xf32>
    %c0_184 = arith.constant 0 : index
    %c0_185 = arith.constant 0 : index
    %c0_186 = arith.constant 0 : index
    %375 = vector.load %arg4[%c0_184, %c0_185, %c0_186] : memref<2x8x32xf32, #tpu.memory_space<vmem>>, vector<2x8x32xf32>
    "tpu.trace_start"() <{level = 10 : i32, message = "bqs,bsh->bqh"}> : () -> ()
    %cst_187 = arith.constant dense<0.000000e+00> : vector<2x1x32xf32>
    %376 = tpu.matmul %374, %375, %cst_187 {dimension_numbers = #tpu.dot_dimension_numbers<[2], [1], [1], [2], [0, 0, 0, 1, 1, 2], [0], [0]>} : vector<2x1x8xf32>, vector<2x8x32xf32>, vector<2x1x32xf32> -> vector<2x1x32xf32>
    "tpu.trace_stop"() : () -> ()
    %377 = vector.shape_cast %376 : vector<2x1x32xf32> to vector<2x32xf32>
    %c0_188 = arith.constant 0 : index
    %c0_189 = arith.constant 0 : index
    %c0_190 = arith.constant 0 : index
    %378 = vector.load %arg15[%c0_188, %c0_189, %c0_190] : memref<2x32x16xf32, #tpu.memory_space<vmem>>, vector<1x32x16xf32>
    %379 = vector.shape_cast %378 : vector<1x32x16xf32> to vector<32x16xf32>
    %cst_191 = arith.constant dense<0.000000e+00> : vector<2x16xf32>
    %380 = tpu.matmul %377, %379, %cst_191 {dimension_numbers = #tpu.dot_dimension_numbers<[1], [0], [0], [1], [0, 0, 1, 1], [], []>} : vector<2x32xf32>, vector<32x16xf32>, vector<2x16xf32> -> vector<2x16xf32>
    %c1_192 = arith.constant 1 : index
    %c0_193 = arith.constant 0 : index
    %c0_194 = arith.constant 0 : index
    %381 = vector.load %arg15[%c1_192, %c0_193, %c0_194] : memref<2x32x16xf32, #tpu.memory_space<vmem>>, vector<1x32x16xf32>
    %382 = vector.shape_cast %381 : vector<1x32x16xf32> to vector<32x16xf32>
    %cst_195 = arith.constant dense<0.000000e+00> : vector<2x16xf32>
    %383 = tpu.matmul %347, %382, %cst_195 {dimension_numbers = #tpu.dot_dimension_numbers<[1], [0], [0], [1], [0, 0, 1, 1], [], []>} : vector<2x32xf32>, vector<32x16xf32>, vector<2x16xf32> -> vector<2x16xf32>
    %384 = arith.addf %380, %383 : vector<2x16xf32>
    %c0_196 = arith.constant 0 : index
    %c0_197 = arith.constant 0 : index
    %385 = vector.load %arg16[%c0_196, %c0_197] : memref<1x16xf32, #tpu.memory_space<vmem>>, vector<1x16xf32>
    %386 = vector.broadcast %385 : vector<1x16xf32> to vector<2x16xf32>
    %387 = arith.addf %384, %386 : vector<2x16xf32>
    %cst_198 = arith.constant dense<0xFF800000> : vector<2xf32>
    %388 = vector.multi_reduction <maximumf>, %387, %cst_198 [1] : vector<2x16xf32> to vector<2xf32>
    %389 = vector.shape_cast %388 : vector<2xf32> to vector<2x1xf32>
    %390 = vector.broadcast %389 : vector<2x1xf32> to vector<2x16xf32>
    %391 = arith.cmpf oeq, %387, %390 : vector<2x16xf32>
    %c16_i32_199 = arith.constant 16 : i32
    %392 = vector.broadcast %c16_i32_199 : i32 to vector<2x16xi32>
    %393 = arith.select %391, %25, %392 : vector<2x16xi1>, vector<2x16xi32>
    %cst_200 = arith.constant dense<2147483647> : vector<2xi32>
    %394 = vector.multi_reduction <minsi>, %393, %cst_200 [1] : vector<2x16xi32> to vector<2xi32>
    %395 = vector.shape_cast %394 : vector<2xi32> to vector<2x1xi32>
    %396 = vector.broadcast %389 : vector<2x1xf32> to vector<2x16xf32>
    %397 = arith.subf %387, %396 : vector<2x16xf32>
    %398 = math.exp %397 : vector<2x16xf32>
    %cst_201 = arith.constant dense<0.000000e+00> : vector<2xf32>
    %399 = vector.multi_reduction <add>, %398, %cst_201 [1] : vector<2x16xf32> to vector<2xf32>
    %400 = vector.shape_cast %399 : vector<2xf32> to vector<2x1xf32>
    %401 = math.log %400 : vector<2x1xf32>
    %402 = arith.subf %306, %401 : vector<2x1xf32>
    %403 = arith.mulf %398, %397 : vector<2x16xf32>
    %cst_202 = arith.constant dense<0.000000e+00> : vector<2xf32>
    %404 = vector.multi_reduction <add>, %403, %cst_202 [1] : vector<2x16xf32> to vector<2xf32>
    %405 = vector.shape_cast %404 : vector<2xf32> to vector<2x1xf32>
    %406 = arith.divf %405, %400 : vector<2x1xf32>
    %407 = arith.subf %406, %401 : vector<2x1xf32>
    %408 = arith.addf %312, %407 : vector<2x1xf32>
    %409 = tpu.concatenate %107, %203, %299, %395 in 1 : vector<2x1xi32>, vector<2x1xi32>, vector<2x1xi32>, vector<2x1xi32> -> vector<2x4xi32>
    %c0_203 = arith.constant 0 : index
    %c0_204 = arith.constant 0 : index
    %410 = vector.load %arg17[%c0_203, %c0_204] : memref<2x4xi32, #tpu.memory_space<vmem>>, vector<2x4xi32>
    tpu.vector_store %arg17[%c0_203, %c0_204], %409 {strides = array<i32>} : memref<2x4xi32, #tpu.memory_space<vmem>>, vector<2x4xi32>,
    %411 = tpu.concatenate %408, %402 in 1 : vector<2x1xf32>, vector<2x1xf32> -> vector<2x2xf32>
    %c0_205 = arith.constant 0 : index
    %c0_206 = arith.constant 0 : index
    %412 = vector.load %arg19[%c0_205, %c0_206] : memref<2x2xf32, #tpu.memory_space<vmem>>, vector<2x2xf32>
    tpu.vector_store %arg19[%c0_205, %c0_206], %411 {strides = array<i32>} : memref<2x2xf32, #tpu.memory_space<vmem>>, vector<2x2xf32>,
    return
  }
}

</mosaic_0001>

<llo_original>
// kernel: attn_decoder_forward.1
$region0: #{attn_decoder_forward.1}
  #allocation0 [shape = 'u32[]', space=smem, size = 0x4, offset = 0x4, fixed_abs, tag = 'smem constant byte address 0x4 - core index']
  #allocation1 [shape = 'u32[72,128]{1,0:T(1,128)}', space=vmem, size = 0x9000, scoped, tag = 'internal scratch']
  #allocation2 [shape = 'f32[2,8,32]{2,1,0:T(8,128)}', space=vmem, size = 0x2000, scoped, tag = 'scratch operand']
  #allocation3 [shape = 'f32[1,1]{1,0:T(1,128)S(1)}', space=vmem, size = 0x200, scoped, tag = 'scoped memory for attn_decoder_forward.1']
  %s0 = inlined_call_operand.hbm [shape: f32[1,32], index: 0, kind: input, shape index: {}]
  %s1 = inlined_call_operand.hbm [shape: f32[16,32], index: 1, kind: input, shape index: {}]
  %s2 = inlined_call_operand.vmem [shape: f32[2,32], index: 2, kind: input, shape index: {}]
  %s3 = inlined_call_operand.vmem [shape: f32[2,32], index: 3, kind: input, shape index: {}]
  %s4 = inlined_call_operand.vmem [shape: f32[2,8,32], index: 4, kind: input, shape index: {}]
  %s5 = inlined_call_operand.vmem [shape: s32[2,1], index: 5, kind: input, shape index: {}]
  %s6 = inlined_call_operand.vmem [shape: f32[32,128], index: 6, kind: input, shape index: {}]
  %s7 = inlined_call_operand.vmem [shape: f32[32,128], index: 7, kind: input, shape index: {}]
  %s8 = inlined_call_operand.hbm [shape: f32[1,128], index: 8, kind: input, shape index: {}]
  %s9 = inlined_call_operand.vmem [shape: f32[32,32], index: 9, kind: input, shape index: {}]
  %s10 = inlined_call_operand.hbm [shape: f32[1,32], index: 10, kind: input, shape index: {}]
  %s11 = inlined_call_operand.vmem [shape: f32[32,32], index: 11, kind: input, shape index: {}]
  %s12 = inlined_call_operand.hbm [shape: f32[1,32], index: 12, kind: input, shape index: {}]
  %s13 = inlined_call_operand.vmem [shape: f32[32,1], index: 13, kind: input, shape index: {}]
  %s14 = inlined_call_operand.<no memory space> [shape: f32[1,1], index: 14, kind: input, shape index: {}]
  %s15 = inlined_call_operand.vmem [shape: f32[2,32,16], index: 15, kind: input, shape index: {}]
  %s16 = inlined_call_operand.hbm [shape: f32[1,16], index: 16, kind: input, shape index: {}]
  %s17 = inlined_call_operand.hbm [shape: s32[2,4], index: 17, kind: output, shape index: {0}]
  %s18 = inlined_call_operand.hbm [shape: f32[2,4,8], index: 18, kind: output, shape index: {1}]
  %s19 = inlined_call_operand.vmem [shape: f32[2,2], index: 19, kind: output, shape index: {2}]
  %20 = xla_tuple %s17, %s18, %s19
  %s21 = sld [smem:[#allocation0]]
  $region118: #{attn_decoder_forward.1} parent=0
    _
  %s23 = ssub.s32 1, %s21
  %s24 = scalar_select 0, %s23, %s21
  %v25 = vstv %s14
  %26 = vst [vmem:[#allocation3] sm:$0x1] %v25
  $region1: #{attn_decoder_forward.1} parent=0
    #allocation4 [shape = 'u8[512]{0}', space=vmem, size = 0x400, scoped, tag = 'input window, operand 0, single buffered']
    #allocation5 [shape = 's32[1]{0}', space=sflag, size = 0x4, scoped, tag = 'scoped memory for attn_decoder_forward.1']
    #allocation6 [shape = 's32[1]{0}', space=sflag, size = 0x4, scoped, tag = 'scoped memory for attn_decoder_forward.1']
    #allocation7 [shape = 'u8[8192]{0}', space=vmem, size = 0x2000, scoped, tag = 'input window, operand 1, single buffered']
    #allocation8 [shape = 's32[1]{0}', space=sflag, size = 0x4, scoped, tag = 'scoped memory for attn_decoder_forward.1']
    #allocation9 [shape = 'u8[512]{0}', space=vmem, size = 0x400, scoped, tag = 'input window, operand 8, single buffered']
    #allocation10 [shape = 'u8[512]{0}', space=vmem, size = 0x400, scoped, tag = 'input window, operand 10, single buffered']
    #allocation11 [shape = 's32[1]{0}', space=sflag, size = 0x4, scoped, tag = 'scoped memory for attn_decoder_forward.1']
    #allocation12 [shape = 'u8[512]{0}', space=vmem, size = 0x400, scoped, tag = 'input window, operand 12, single buffered']
    #allocation13 [shape = 'u8[512]{0}', space=vmem, size = 0x400, scoped, tag = 'input window, operand 16, single buffered']
    #allocation14 [shape = 's32[1]{0}', space=sflag, size = 0x4, scoped, tag = 'scoped memory for attn_decoder_forward.1']
    #allocation15 [shape = 'u8[1024]{0}', space=vmem, size = 0x400, scoped, tag = 'output window, operand 0, single buffered']
    #allocation16 [shape = 'u8[4096]{0}', space=vmem, size = 0x1000, scoped, tag = 'output window, operand 1, single buffered']
    #allocation17 [shape = 's32[1]{0}', space=sflag, size = 0x4, scoped, tag = 'scoped memory for attn_decoder_forward.1']
    %27 = vsyncpa [#allocation5], 0
    %28 = vsyncpa [#allocation8], 0
    %29 = vsyncpa [#allocation11], 0
    %30 = vsyncpa [#allocation14], 0
    %31 = vsyncpa [#allocation6], 0
    %32 = vsyncpa [#allocation17], 0
    // Predicated region
    $region2: #{attn_decoder_forward.1} parent=1 // pred_check
      _
    $region3: #{attn_decoder_forward.1} parent=1 // pred_check_branch
      %34 = sbr.rel (0) target = $region5
    $region4: #{attn_decoder_forward.1} parent=1 // pred_region
      %36 = vsyncadd [#allocation5], 0
      %s38 = sshll.u32 %s0, 4
      %s39 = int_to_ptr.hbm [resolvable:$true] %s38
      %s40 = sshll.u32 [#allocation4], 4
      %s41 = int_to_ptr.vmem [resolvable:$true] %s40
      %43 = dma.hbm_to_vmem [thread:$0]  %s39, 16, %s41, [#allocation5]
    $region5: #{attn_decoder_forward.1} parent=1 // pred_fallthru
      _
    // Predicated region
    $region6: #{attn_decoder_forward.1} parent=1 // pred_check
      _
    $region7: #{attn_decoder_forward.1} parent=1 // pred_check_branch
      %45 = sbr.rel (0) target = $region9
    $region8: #{attn_decoder_forward.1} parent=1 // pred_region
      %47 = vsyncadd [#allocation8], 0
      %s48 = sshll.u32 %s1, 4
      %s49 = int_to_ptr.hbm [resolvable:$true] %s48
      %s50 = sshll.u32 [#allocation7], 4
      %s51 = int_to_ptr.vmem [resolvable:$true] %s50
      %56 = dma.hbm_to_vmem [thread:$0]  %s49, 256, %s51, [#allocation8], 128, 128, 8
    $region9: #{attn_decoder_forward.1} parent=1 // pred_fallthru
      _
    // Predicated region
    $region10: #{attn_decoder_forward.1} parent=1 // pred_check
      _
    $region11: #{attn_decoder_forward.1} parent=1 // pred_check_branch
      %58 = sbr.rel (0) target = $region13
    $region12: #{attn_decoder_forward.1} parent=1 // pred_region
      _
    $region13: #{attn_decoder_forward.1} parent=1 // pred_fallthru
      _
    // Predicated region
    $region14: #{attn_decoder_forward.1} parent=1 // pred_check
      _
    $region15: #{attn_decoder_forward.1} parent=1 // pred_check_branch
      %60 = sbr.rel (0) target = $region17
    $region16: #{attn_decoder_forward.1} parent=1 // pred_region
      _
    $region17: #{attn_decoder_forward.1} parent=1 // pred_fallthru
      _
    // Predicated region
    $region18: #{attn_decoder_forward.1} parent=1 // pred_check
      _
    $region19: #{attn_decoder_forward.1} parent=1 // pred_check_branch
      %62 = sbr.rel (0) target = $region21
    $region20: #{attn_decoder_forward.1} parent=1 // pred_region
      _
    $region21: #{attn_decoder_forward.1} parent=1 // pred_fallthru
      _
    // Predicated region
    $region22: #{attn_decoder_forward.1} parent=1 // pred_check
      _
    $region23: #{attn_decoder_forward.1} parent=1 // pred_check_branch
      %64 = sbr.rel (0) target = $region25
    $region24: #{attn_decoder_forward.1} parent=1 // pred_region
      _
    $region25: #{attn_decoder_forward.1} parent=1 // pred_fallthru
      _
    // Predicated region
    $region26: #{attn_decoder_forward.1} parent=1 // pred_check
      _
    $region27: #{attn_decoder_forward.1} parent=1 // pred_check_branch
      %66 = sbr.rel (0) target = $region29
    $region28: #{attn_decoder_forward.1} parent=1 // pred_region
      _
    $region29: #{attn_decoder_forward.1} parent=1 // pred_fallthru
      _
    // Predicated region
    $region30: #{attn_decoder_forward.1} parent=1 // pred_check
      _
    $region31: #{attn_decoder_forward.1} parent=1 // pred_check_branch
      %68 = sbr.rel (0) target = $region33
    $region32: #{attn_decoder_forward.1} parent=1 // pred_region
      _
    $region33: #{attn_decoder_forward.1} parent=1 // pred_fallthru
      _
    // Predicated region
    $region34: #{attn_decoder_forward.1} parent=1 // pred_check
      _
    $region35: #{attn_decoder_forward.1} parent=1 // pred_check_branch
      %70 = sbr.rel (0) target = $region37
    $region36: #{attn_decoder_forward.1} parent=1 // pred_region
      %72 = vsyncadd [#allocation8], 0
      %s74 = sshll.u32 %s8, 4
      %s75 = int_to_ptr.hbm [resolvable:$true] %s74
      %s76 = sshll.u32 [#allocation9], 4
      %s77 = int_to_ptr.vmem [resolvable:$true] %s76
      %79 = dma.hbm_to_vmem [thread:$0]  %s75, 16, %s77, [#allocation8]
    $region37: #{attn_decoder_forward.1} parent=1 // pred_fallthru
      _
    // Predicated region
    $region38: #{attn_decoder_forward.1} parent=1 // pred_check
      _
    $region39: #{attn_decoder_forward.1} parent=1 // pred_check_branch
      %81 = sbr.rel (0) target = $region41
    $region40: #{attn_decoder_forward.1} parent=1 // pred_region
      _
    $region41: #{attn_decoder_forward.1} parent=1 // pred_fallthru
      _
    // Predicated region
    $region42: #{attn_decoder_forward.1} parent=1 // pred_check
      _
    $region43: #{attn_decoder_forward.1} parent=1 // pred_check_branch
      %83 = sbr.rel (0) target = $region45
    $region44: #{attn_decoder_forward.1} parent=1 // pred_region
      %85 = vsyncadd [#allocation11], 0
      %s87 = sshll.u32 %s10, 4
      %s88 = int_to_ptr.hbm [resolvable:$true] %s87
      %s89 = sshll.u32 [#allocation10], 4
      %s90 = int_to_ptr.vmem [resolvable:$true] %s89
      %92 = dma.hbm_to_vmem [thread:$0]  %s88, 16, %s90, [#allocation11]
    $region45: #{attn_decoder_forward.1} parent=1 // pred_fallthru
      _
    // Predicated region
    $region46: #{attn_decoder_forward.1} parent=1 // pred_check
      _
    $region47: #{attn_decoder_forward.1} parent=1 // pred_check_branch
      %94 = sbr.rel (0) target = $region49
    $region48: #{attn_decoder_forward.1} parent=1 // pred_region
      _
    $region49: #{attn_decoder_forward.1} parent=1 // pred_fallthru
      _
    // Predicated region
    $region50: #{attn_decoder_forward.1} parent=1 // pred_check
      _
    $region51: #{attn_decoder_forward.1} parent=1 // pred_check_branch
      %96 = sbr.rel (0) target = $region53
    $region52: #{attn_decoder_forward.1} parent=1 // pred_region
      %98 = vsyncadd [#allocation11], 0
      %s100 = sshll.u32 %s12, 4
      %s101 = int_to_ptr.hbm [resolvable:$true] %s100
      %s102 = sshll.u32 [#allocation12], 4
      %s103 = int_to_ptr.vmem [resolvable:$true] %s102
      %105 = dma.hbm_to_vmem [thread:$0]  %s101, 16, %s103, [#allocation11]
    $region53: #{attn_decoder_forward.1} parent=1 // pred_fallthru
      _
    // Predicated region
    $region54: #{attn_decoder_forward.1} parent=1 // pred_check
      _
    $region55: #{attn_decoder_forward.1} parent=1 // pred_check_branch
      %107 = sbr.rel (0) target = $region57
    $region56: #{attn_decoder_forward.1} parent=1 // pred_region
      _
    $region57: #{attn_decoder_forward.1} parent=1 // pred_fallthru
      _
    // Predicated region
    $region58: #{attn_decoder_forward.1} parent=1 // pred_check
      _
    $region59: #{attn_decoder_forward.1} parent=1 // pred_check_branch
      %109 = sbr.rel (0) target = $region61
    $region60: #{attn_decoder_forward.1} parent=1 // pred_region
      _
    $region61: #{attn_decoder_forward.1} parent=1 // pred_fallthru
      _
    // Predicated region
    $region62: #{attn_decoder_forward.1} parent=1 // pred_check
      _
    $region63: #{attn_decoder_forward.1} parent=1 // pred_check_branch
      %111 = sbr.rel (0) target = $region65
    $region64: #{attn_decoder_forward.1} parent=1 // pred_region
      _
    $region65: #{attn_decoder_forward.1} parent=1 // pred_fallthru
      _
    // Predicated region
    $region66: #{attn_decoder_forward.1} parent=1 // pred_check
      _
    $region67: #{attn_decoder_forward.1} parent=1 // pred_check_branch
      %113 = sbr.rel (0) target = $region69
    $region68: #{attn_decoder_forward.1} parent=1 // pred_region
      %115 = vsyncadd [#allocation14], 0
      %s117 = sshll.u32 %s16, 4
      %s118 = int_to_ptr.hbm [resolvable:$true] %s117
      %s119 = sshll.u32 [#allocation13], 4
      %s120 = int_to_ptr.vmem [resolvable:$true] %s119
      %122 = dma.hbm_to_vmem [thread:$0]  %s118, 16, %s120, [#allocation14]
    $region69: #{attn_decoder_forward.1} parent=1 // pred_fallthru
      _
    // Predicated region
    $region70: #{attn_decoder_forward.1} parent=1 // pred_check
      _
    $region71: #{attn_decoder_forward.1} parent=1 // pred_check_branch
      %124 = sbr.rel (0) target = $region73
    $region72: #{attn_decoder_forward.1} parent=1 // pred_region
      %126 = dma.done [#allocation5], 16
    $region73: #{attn_decoder_forward.1} parent=1 // pred_fallthru
      _
    // Predicated region
    $region74: #{attn_decoder_forward.1} parent=1 // pred_check
      _
    $region75: #{attn_decoder_forward.1} parent=1 // pred_check_branch
      %128 = sbr.rel (0) target = $region77
    $region76: #{attn_decoder_forward.1} parent=1 // pred_region
      %130 = dma.done [#allocation8], 256
    $region77: #{attn_decoder_forward.1} parent=1 // pred_fallthru
      _
    // Predicated region
    $region78: #{attn_decoder_forward.1} parent=1 // pred_check
      _
    $region79: #{attn_decoder_forward.1} parent=1 // pred_check_branch
      %132 = sbr.rel (0) target = $region81
    $region80: #{attn_decoder_forward.1} parent=1 // pred_region
      %134 = dma.done [#allocation8], 16
    $region81: #{attn_decoder_forward.1} parent=1 // pred_fallthru
      _
    // Predicated region
    $region82: #{attn_decoder_forward.1} parent=1 // pred_check
      _
    $region83: #{attn_decoder_forward.1} parent=1 // pred_check_branch
      %136 = sbr.rel (0) target = $region85
    $region84: #{attn_decoder_forward.1} parent=1 // pred_region
      %138 = dma.done [#allocation11], 16
    $region85: #{attn_decoder_forward.1} parent=1 // pred_fallthru
      _
    // Predicated region
    $region86: #{attn_decoder_forward.1} parent=1 // pred_check
      _
    $region87: #{attn_decoder_forward.1} parent=1 // pred_check_branch
      %140 = sbr.rel (0) target = $region89
    $region88: #{attn_decoder_forward.1} parent=1 // pred_region
      %142 = dma.done [#allocation11], 16
    $region89: #{attn_decoder_forward.1} parent=1 // pred_fallthru
      _
    // Predicated region
    $region90: #{attn_decoder_forward.1} parent=1 // pred_check
      _
    $region91: #{attn_decoder_forward.1} parent=1 // pred_check_branch
      %144 = sbr.rel (0) target = $region93
    $region92: #{attn_decoder_forward.1} parent=1 // pred_region
      %146 = dma.done [#allocation14], 16
    $region93: #{attn_decoder_forward.1} parent=1 // pred_fallthru
      _
    %v147 = vld [vmem:[%s4] sm:$0xff]
    %v148 = vld [vmem:[%s4 + $0x8] sm:$0xff]
    %v149 = vld [vmem:[%s9] sm:$0xff]
    %v150 = vld [vmem:[%s9 + $0x8] sm:$0xff]
    %v151 = vld [vmem:[%s9 + $0x10] sm:$0xff]
    %v152 = vld [vmem:[%s9 + $0x18] sm:$0xff]
    %v153 = vld [vmem:[#allocation10] sm:$0x1]
    %v155 = vperm.slane %v153, 0
    %vm157 = vcmask 261120
    %v159 = vsel %vm157, %v147, 0
    %v162 = vsel %vm157, %v148, 0
    %164 = vmatpush.msra.mxu0 0.0
    %165 = vmatpush.msra.mxu0 0.0
    %166 = vmatpush.msra.mxu0 0.0
    %167 = vmatpush.msra.mxu0 0.0
    %168 = vmatpush.msra.mxu0 0.0
    %169 = vmatpush.msra.mxu0 0.0
    %170 = vmatpush.msra.mxu0 0.0
    %171 = vmatpush.msra.mxu0 0.0
    %172 = vmatpush.msra.mxu0 0.0
    %173 = vmatpush.msra.mxu0 0.0
    %174 = vmatpush.msra.mxu0 0.0
    %175 = vmatpush.msra.mxu0 0.0
    %176 = vmatpush.msra.mxu0 %v152
    %177 = vmatpush.msra.mxu0 %v151
    %178 = vmatpush.msra.mxu0 %v150
    %179 = vmatpush.msra.mxu0 %v149
    %180 = vmatmul.f32.gmra.mxu0 %v159
    %v181 = vpop.f32.mrf.mxu0
    %v182 = vadd.f32 %v155, %v181
    %183 = vmatmul.f32.gmra.mxu0 %v162
    %v184 = vpop.f32.mrf.mxu0
    %v185 = vadd.f32 %v155, %v184
    %186 = vdwg.mxu0
    %187 = vst.msk [vmem:[#allocation2] sm:$0xff] %vm157, %v182
    %188 = vst.msk [vmem:[#allocation2 + $0x8] sm:$0xff] %vm157, %v185
    %v189 = vld [vmem:[%s2] sm:$0x3]
    %v190 = vld [vmem:[%s7] sm:$0xff]
    %v191 = vld [vmem:[%s7 + $0x8] sm:$0xff]
    %v192 = vld [vmem:[%s7 + $0x10] sm:$0xff]
    %v193 = vld [vmem:[%s7 + $0x18] sm:$0xff]
    %v194 = vld [vmem:[#allocation9] sm:$0x1]
    %v196 = vperm.slane %v194, 0
    %v199 = vsel %vm157, %v189, 0
    %201 = vmatpush.msra.mxu0 0.0
    %202 = vmatpush.msra.mxu0 0.0
    %203 = vmatpush.msra.mxu0 0.0
    %204 = vmatpush.msra.mxu0 0.0
    %205 = vmatpush.msra.mxu0 0.0
    %206 = vmatpush.msra.mxu0 0.0
    %207 = vmatpush.msra.mxu0 0.0
    %208 = vmatpush.msra.mxu0 0.0
    %209 = vmatpush.msra.mxu0 0.0
    %210 = vmatpush.msra.mxu0 0.0
    %211 = vmatpush.msra.mxu0 0.0
    %212 = vmatpush.msra.mxu0 0.0
    %213 = vmatpush.msra.mxu0 %v193
    %214 = vmatpush.msra.mxu0 %v192
    %215 = vmatpush.msra.mxu0 %v191
    %216 = vmatpush.msra.mxu0 %v190
    %217 = vmatmul.f32.gmra.mxu0 %v199
    %v218 = vpop.f32.mrf.mxu0
    %v219 = vadd.f32 %v196, %v218
    %220 = vdwg.mxu0
    %v221 = vlaneseq
    %v222 = vand.u32 %v221, 127
    %v223 = vld [vmem:[%s5] sm:$0x3]
    %224 = vset.pattern.permute.xlu0 0
    %225 = vperm.xlu0 %224, %v223
    %v226 = vpop.permute.xlu0 %225
    %vm227 = vcmp.ge.s32.totalorder %v222, %v226
    %v228 = vsel %vm227, -1e+30, 0.0
    %v229 = vld [vmem:[#allocation3] sm:$0x1]
    %v231 = vperm.slane %v229, 0
    %232 = vset.pattern.permute.xlu0 0
    %233 = vperm.xlu0 %232, %v231
    %v234 = vpop.permute.xlu0 %233
    %v236 = vadd.f32 %v228, %v234
    %v237 = vld [vmem:[#allocation4] sm:$0x1]
    %v239 = vperm.slane %v237, 0
    %v240 = vld [vmem:[%s6] sm:$0xff]
    %v241 = vld [vmem:[%s6 + $0x8] sm:$0xff]
    %v242 = vld [vmem:[%s6 + $0x10] sm:$0xff]
    %v243 = vld [vmem:[%s6 + $0x18] sm:$0xff]
    %v244 = vsel %vm157, %v239, 0
    %246 = vmatpush.msra.mxu0 0.0
    %247 = vmatpush.msra.mxu0 0.0
    %248 = vmatpush.msra.mxu0 0.0
    %249 = vmatpush.msra.mxu0 0.0
    %250 = vmatpush.msra.mxu0 0.0
    %251 = vmatpush.msra.mxu0 0.0
    %252 = vmatpush.msra.mxu0 0.0
    %253 = vmatpush.msra.mxu0 0.0
    %254 = vmatpush.msra.mxu0 0.0
    %255 = vmatpush.msra.mxu0 0.0
    %256 = vmatpush.msra.mxu0 0.0
    %257 = vmatpush.msra.mxu0 0.0
    %258 = vmatpush.msra.mxu0 %v243
    %259 = vmatpush.msra.mxu0 %v242
    %260 = vmatpush.msra.mxu0 %v241
    %261 = vmatpush.msra.mxu0 %v240
    %262 = vmatmul.f32.gmra.mxu0 %v244
    %v263 = vpop.f32.mrf.mxu0
    %v264 = vadd.f32 %v219, %v263
    %265 = vdwg.mxu0
    %v266 = vxor.u32 %v264, 2147483648
    %v267 = vmul.f32 %v266, 1.442695
    %v268 = vpow.pop %v267
    %v269 = vadd.f32 %v268, 1.0
    %v270 = vrcp.pop %v269
    %v271 = vmul.f32 %v269, %v270
    %v272 = vsub.f32 1.0, %v271
    %v273 = vmul.f32 %v270, %v272
    %v274 = vadd.f32 %v270, %v273
    %vm275 = vweird.f32 %v269
    %vm276 = vweird.f32 %v270
    %vm277 = vmor %vm275, %vm276
    %v278 = vsel %vm277, %v270, %v274
    %v279 = vand.u32 2147483647, %v269
    %vm280 = vcmp.eq.f32.partialorder %v279, 8.507059e+37
    %v281 = vand.u32 %v269, 2147483648
    %v282 = vor.u32 1.1754944e-38, %v281
    %v283 = vsel %vm280, %v282, %v278
    %v284 = vmul.f32 1.0, %v283
    %v285 = vtanh.pop %v264
    %v286 = vld [vmem:[%s3] sm:$0x3]
    %288 = vrot.lane.b32.xlu0 %v286, 32
    %v289 = vpop.permute.xlu0 %288
    %v291 = vmul.f32 %v284, %v289
    %293 = vrot.lane.b32.xlu0 %v285, 64
    %v294 = vpop.permute.xlu0 %293
    %v296 = vmul.f32 %v284, %v294
    %298 = vrot.lane.b32.xlu0 %v296, 32
    %v299 = vpop.permute.xlu0 %298
    %v301 = vadd.f32 %v291, %v299
    %v302 = vtanh.pop %v301
    %304 = vrot.lane.b32.xlu0 %v302, 64
    %v305 = vpop.permute.xlu0 %304
    %v307 = vmul.f32 %v284, %v305
    %v308 = vld [vmem:[%s11] sm:$0xff]
    %v309 = vld [vmem:[%s11 + $0x8] sm:$0xff]
    %v310 = vld [vmem:[%s11 + $0x10] sm:$0xff]
    %v311 = vld [vmem:[%s11 + $0x18] sm:$0xff]
    %v312 = vld [vmem:[#allocation12] sm:$0x1]
    %v314 = vperm.slane %v312, 0
    %317 = vrot.lane.b32.xlu0 %v307, 32
    %v318 = vpop.permute.xlu0 %317
    %v319 = vsel %vm157, %v318, 0
    %321 = vmatpush.msra.mxu0 0.0
    %322 = vmatpush.msra.mxu0 0.0
    %323 = vmatpush.msra.mxu0 0.0
    %324 = vmatpush.msra.mxu0 0.0
    %325 = vmatpush.msra.mxu0 0.0
    %326 = vmatpush.msra.mxu0 0.0
    %327 = vmatpush.msra.mxu0 0.0
    %328 = vmatpush.msra.mxu0 0.0
    %329 = vmatpush.msra.mxu0 0.0
    %330 = vmatpush.msra.mxu0 0.0
    %331 = vmatpush.msra.mxu0 0.0
    %332 = vmatpush.msra.mxu0 0.0
    %333 = vmatpush.msra.mxu0 %v311
    %334 = vmatpush.msra.mxu0 %v310
    %335 = vmatpush.msra.mxu0 %v309
    %336 = vmatpush.msra.mxu0 %v308
    %337 = vmatmul.f32.gmra.mxu0 %v319
    %v338 = vpop.f32.mrf.mxu0
    %v339 = vadd.f32 %v314, %v338
    %340 = vdwg.mxu0
    %v341 = vld [vmem:[#allocation2] sm:$0xff]
    %v342 = vld [vmem:[#allocation2 + $0x8] sm:$0xff]
    %v344 = vrot.slane %v339, 1
    %v345 = vperm.slane %v339, 0
    %v346 = vperm.slane %v344, 0
    %v349 = vadd.f32 %v341, %v345
    %v350 = vadd.f32 %v342, %v346
    %v351 = vtanh.pop %v349
    %v352 = vtanh.pop %v350
    %v353 = vld [vmem:[%s13] sm:$0xff]
    %v354 = vld [vmem:[%s13 + $0x8] sm:$0xff]
    %v355 = vld [vmem:[%s13 + $0x10] sm:$0xff]
    %v356 = vld [vmem:[%s13 + $0x18] sm:$0xff]
    %v358 = vsel %vm157, %v351, 0
    %v361 = vsel %vm157, %v352, 0
    %363 = vmatpush.msra.mxu0 0.0
    %364 = vmatpush.msra.mxu0 0.0
    %365 = vmatpush.msra.mxu0 0.0
    %366 = vmatpush.msra.mxu0 0.0
    %367 = vmatpush.msra.mxu0 0.0
    %368 = vmatpush.msra.mxu0 0.0
    %369 = vmatpush.msra.mxu0 0.0
    %370 = vmatpush.msra.mxu0 0.0
    %371 = vmatpush.msra.mxu0 0.0
    %372 = vmatpush.msra.mxu0 0.0
    %373 = vmatpush.msra.mxu0 0.0
    %374 = vmatpush.msra.mxu0 0.0
    %375 = vmatpush.msra.mxu0 %v356
    %376 = vmatpush.msra.mxu0 %v355
    %377 = vmatpush.msra.mxu0 %v354
    %378 = vmatpush.msra.mxu0 %v353
    %379 = vmatmul.f32.gmra.mxu0 %v358
    %v380 = vpop.f32.mrf.mxu0
    %v381 = vadd.f32 0.0, %v380
    %382 = vmatmul.f32.gmra.mxu0 %v361
    %v383 = vpop.f32.mrf.mxu0
    %v384 = vadd.f32 0.0, %v383
    %385 = vdwg.mxu0
    %v387 = vperm.slane %v236, 0
    %v388 = vlaneseq
    %v389 = vshrl.u32 %v388, 7
    %391 = vset.pattern.permute.xlu0 %v389
    %392 = vperm.xlu0 %391, %v387
    %v393 = vpop.permute.xlu0 %392
    %v394 = vperm.slane %v236, 1
    %v395 = vlaneseq
    %v396 = vshrl.u32 %v395, 7
    %398 = vset.pattern.permute.xlu0 %v396
    %399 = vperm.xlu0 %398, %v394
    %v400 = vpop.permute.xlu0 %399
    %v403 = vadd.f32 %v381, %v393
    %v404 = vadd.f32 %v384, %v400
    %407 = vset.pattern.permute.xlu0 0
    %408 = vperm.xlu0 %407, %v403
    %v409 = vpop.permute.xlu0 %408
    %410 = vset.pattern.permute.xlu0 0
    %411 = vperm.xlu0 %410, %v404
    %v412 = vpop.permute.xlu0 %411
    %v413 = vperm.slane %v409, %v222
    %v414 = vperm.slane %v412, %v222
    %vm415 = vcmask 1041409
    %v416 = vsel %vm415, %v414, %v413
    %vm418 = vcmask 58368
    %v419 = vsel %vm418, %v416, -inf
    %420 = vmax.xlane.f32.xlu0 %v419
    %v421 = vpop.xlane.xlu0 %420
    %v423 = vperm.slane %v421, 0
    %v424 = vperm.slane %v421, 1
    %v427 = vsub.f32 %v403, %v423
    %v428 = vsub.f32 %v404, %v424
    %v429 = vmul.f32 %v427, 1.442695
    %v430 = vpow.pop %v429
    %v431 = vmul.f32 %v428, 1.442695
    %v432 = vpow.pop %v431
    %435 = vset.pattern.permute.xlu0 0
    %436 = vperm.xlu0 %435, %v430
    %v437 = vpop.permute.xlu0 %436
    %438 = vset.pattern.permute.xlu0 0
    %439 = vperm.xlu0 %438, %v432
    %v440 = vpop.permute.xlu0 %439
    %v441 = vperm.slane %v437, %v222
    %v442 = vperm.slane %v440, %v222
    %v443 = vsel %vm415, %v442, %v441
    %v445 = vsel %vm418, %v443, 0.0
    %446 = vadd.xlane.f32.xlu0 %v445
    %v447 = vpop.xlane.xlu0 %446
    %v449 = vperm.slane %v447, 0
    %v450 = vperm.slane %v447, 1
    %v453 = vrcp.pop %v449
    %v454 = vmul.f32 %v449, %v453
    %v455 = vsub.f32 1.0, %v454
    %v456 = vmul.f32 %v453, %v455
    %v457 = vadd.f32 %v453, %v456
    %vm458 = vweird.f32 %v449
    %vm459 = vweird.f32 %v453
    %vm460 = vmor %vm458, %vm459
    %v461 = vsel %vm460, %v453, %v457
    %v462 = vand.u32 2147483647, %v449
    %vm463 = vcmp.eq.f32.partialorder %v462, 8.507059e+37
    %v464 = vand.u32 %v449, 2147483648
    %v465 = vor.u32 1.1754944e-38, %v464
    %v466 = vsel %vm463, %v465, %v461
    %v467 = vmul.f32 %v430, %v466
    %v468 = vrcp.pop %v450
    %v469 = vmul.f32 %v450, %v468
    %v470 = vsub.f32 1.0, %v469
    %v471 = vmul.f32 %v468, %v470
    %v472 = vadd.f32 %v468, %v471
    %vm473 = vweird.f32 %v450
    %vm474 = vweird.f32 %v468
    %vm475 = vmor %vm473, %vm474
    %v476 = vsel %vm475, %v468, %v472
    %v477 = vand.u32 2147483647, %v450
    %vm478 = vcmp.eq.f32.partialorder %v477, 8.507059e+37
    %v479 = vand.u32 %v450, 2147483648
    %v480 = vor.u32 1.1754944e-38, %v479
    %v481 = vsel %vm478, %v480, %v476
    %v482 = vmul.f32 %v432, %v481
    %485 = vset.pattern.permute.xlu0 0
    %486 = vperm.xlu0 %485, %v467
    %v487 = vpop.permute.xlu0 %486
    %488 = vset.pattern.permute.xlu0 0
    %489 = vperm.xlu0 %488, %v482
    %v490 = vpop.permute.xlu0 %489
    %v491 = vperm.slane %v487, %v222
    %v492 = vperm.slane %v490, %v222
    %vm495 = vcmask 57344
    %496 = vst.msk [vmem:[#allocation16] sm:$0x1] %vm495, %v491
    %497 = vst.msk [vmem:[#allocation16 + $0x4] sm:$0x1] %vm495, %v492
    %v498 = vld [vmem:[%s4] sm:$0xff]
    %v499 = vld [vmem:[%s4 + $0x8] sm:$0xff]
    %vm500 = vcmask 64512
    %v501 = vsel %vm500, %v491, 0
    %503 = vmatpush.msra.mxu0 0.0
    %504 = vmatpush.msra.mxu0 0.0
    %505 = vmatpush.msra.mxu0 0.0
    %506 = vmatpush.msra.mxu0 0.0
    %507 = vmatpush.msra.mxu0 0.0
    %508 = vmatpush.msra.mxu0 0.0
    %509 = vmatpush.msra.mxu0 0.0
    %510 = vmatpush.msra.mxu0 0.0
    %511 = vmatpush.msra.mxu0 0.0
    %512 = vmatpush.msra.mxu0 0.0
    %513 = vmatpush.msra.mxu0 0.0
    %514 = vmatpush.msra.mxu0 0.0
    %515 = vmatpush.msra.mxu0 0.0
    %516 = vmatpush.msra.mxu0 0.0
    %517 = vmatpush.msra.mxu0 0.0
    %518 = vmatpush.msra.mxu0 %v498
    %519 = vmatmul.f32.gmra.mxu0 %v501
    %v520 = vpop.f32.mrf.mxu0
    %v521 = vadd.f32 0.0, %v520
    %522 = vdwg.mxu0
    %v523 = vsel %vm500, %v492, 0
    %525 = vmatpush.msra.mxu0 0.0
    %526 = vmatpush.msra.mxu0 0.0
    %527 = vmatpush.msra.mxu0 0.0
    %528 = vmatpush.msra.mxu0 0.0
    %529 = vmatpush.msra.mxu0 0.0
    %530 = vmatpush.msra.mxu0 0.0
    %531 = vmatpush.msra.mxu0 0.0
    %532 = vmatpush.msra.mxu0 0.0
    %533 = vmatpush.msra.mxu0 0.0
    %534 = vmatpush.msra.mxu0 0.0
    %535 = vmatpush.msra.mxu0 0.0
    %536 = vmatpush.msra.mxu0 0.0
    %537 = vmatpush.msra.mxu0 0.0
    %538 = vmatpush.msra.mxu0 0.0
    %539 = vmatpush.msra.mxu0 0.0
    %540 = vmatpush.msra.mxu0 %v499
    %541 = vmatmul.f32.gmra.mxu0 %v523
    %v542 = vpop.f32.mrf.mxu0
    %v543 = vadd.f32 0.0, %v542
    %544 = vdwg.mxu0
    %v545 = vld [vmem:[%s15] sm:$0xff]
    %v546 = vld [vmem:[%s15 + $0x8] sm:$0xff]
    %v547 = vld [vmem:[%s15 + $0x10] sm:$0xff]
    %v548 = vld [vmem:[%s15 + $0x18] sm:$0xff]
    %s549 = scalar_lea.vmem %s15, 32
    %v550 = vld [vmem:[%s549] sm:$0xff]
    %v551 = vld [vmem:[%s549 + $0x8] sm:$0xff]
    %v552 = vld [vmem:[%s549 + $0x10] sm:$0xff]
    %v553 = vld [vmem:[%s549 + $0x18] sm:$0xff]
    %554 = vmatpush.msra.mxu0 0.0
    %555 = vmatpush.msra.mxu0 0.0
    %556 = vmatpush.msra.mxu0 0.0
    %557 = vmatpush.msra.mxu0 0.0
    %558 = vmatpush.msra.mxu0 0.0
    %559 = vmatpush.msra.mxu0 0.0
    %560 = vmatpush.msra.mxu0 0.0
    %561 = vmatpush.msra.mxu0 0.0
    %562 = vmatpush.msra.mxu0 0.0
    %563 = vmatpush.msra.mxu0 0.0
    %564 = vmatpush.msra.mxu0 0.0
    %565 = vmatpush.msra.mxu0 0.0
    %566 = vmatpush.msra.mxu0 %v553
    %567 = vmatpush.msra.mxu0 %v552
    %568 = vmatpush.msra.mxu0 %v551
    %569 = vmatpush.msra.mxu0 %v550
    %570 = vmatmul.f32.gmra.mxu0 %v319
    %v571 = vpop.f32.mrf.mxu0
    %v572 = vadd.f32 0.0, %v571
    %573 = vdwg.mxu0
    %v576 = vrot.slane %v543, 7
    %v577 = vsel %vm415, %v576, %v521
    %v578 = vsel %vm157, %v577, 0
    %580 = vmatpush.msra.mxu0 0.0
    %581 = vmatpush.msra.mxu0 0.0
    %582 = vmatpush.msra.mxu0 0.0
    %583 = vmatpush.msra.mxu0 0.0
    %584 = vmatpush.msra.mxu0 0.0
    %585 = vmatpush.msra.mxu0 0.0
    %586 = vmatpush.msra.mxu0 0.0
    %587 = vmatpush.msra.mxu0 0.0
    %588 = vmatpush.msra.mxu0 0.0
    %589 = vmatpush.msra.mxu0 0.0
    %590 = vmatpush.msra.mxu0 0.0
    %591 = vmatpush.msra.mxu0 0.0
    %592 = vmatpush.msra.mxu0 %v548
    %593 = vmatpush.msra.mxu0 %v547
    %594 = vmatpush.msra.mxu0 %v546
    %595 = vmatpush.msra.mxu0 %v545
    %596 = vmatmul.f32.gmra.mxu0 %v578
    %v597 = vpop.f32.mrf.mxu0
    %v598 = vadd.f32 %v572, %v597
    %599 = vdwg.mxu0
    %v600 = vld [vmem:[#allocation13] sm:$0x1]
    %v602 = vperm.slane %v600, 0
    %v604 = vadd.f32 %v598, %v602
    %vm605 = vcmask 123904
    %v606 = vsel %vm605, %v604, -inf
    %607 = vmax.xlane.f32.xlu0 %v606
    %v608 = vpop.xlane.xlu0 %607
    %vm609 = vcmp.eq.f32.partialorder %v604, %v608
    %v610 = vsel %vm609, %v222, 16
    %v611 = vsel %vm605, %v610, 2147483647
    %v612 = vand.u32 %v611, 65535
    %v613 = vshra.s32 %v611, 16
    %v614 = vcvt.s32.f32 %v612
    %v615 = vcvt.s32.f32 %v613
    %616 = vmin.xlane.f32.xlu0 %v615
    %v617 = vpop.xlane.xlu0 %616
    %vm618 = vcmp.eq.f32.partialorder %v615, %v617
    %v619 = vsel %vm618, %v614, inf
    %620 = vmin.xlane.f32.xlu0 %v619
    %v621 = vpop.xlane.xlu0 %620
    %v622 = vcvt.f32.s32 %v621
    %v623 = vcvt.f32.s32 %v617
    %v624 = vshll.u32 %v623, 16
    %v625 = vadd.s32 %v624, %v622
    %v626 = vsub.f32 %v604, %v608
    %v627 = vmul.f32 %v626, 1.442695
    %v628 = vpow.pop %v627
    %v629 = vsel %vm605, %v628, 0.0
    %630 = vadd.xlane.f32.xlu0 %v629
    %v631 = vpop.xlane.xlu0 %630
    %v632 = vlog2.pop %v631
    %v633 = vmul.f32 %v632, 0.6931472
    %v634 = vsub.f32 0.0, %v633
    %v635 = vmul.f32 %v628, %v626
    %v636 = vsel %vm605, %v635, 0.0
    %637 = vadd.xlane.f32.xlu0 %v636
    %v638 = vpop.xlane.xlu0 %637
    %v639 = vrcp.pop %v631
    %v640 = vmul.f32 %v631, %v639
    %v641 = vsub.f32 1.0, %v640
    %v642 = vmul.f32 %v639, %v641
    %v643 = vadd.f32 %v639, %v642
    %vm644 = vweird.f32 %v631
    %vm645 = vweird.f32 %v639
    %vm646 = vmor %vm644, %vm645
    %v647 = vsel %vm646, %v639, %v643
    %v648 = vand.u32 2147483647, %v631
    %vm649 = vcmp.eq.f32.partialorder %v648, 8.507059e+37
    %v650 = vand.u32 %v631, 2147483648
    %v651 = vor.u32 1.1754944e-38, %v650
    %v652 = vsel %vm649, %v651, %v647
    %v653 = vmul.f32 %v638, %v652
    %v654 = vsub.f32 %v653, %v633
    %v655 = vadd.f32 %v654, 0.0
    %vm656 = vcmp.eq.s32.totalorder %v222, %v625
    %v657 = vsel %vm656, 1, 0
    %v658 = vcvt.s32.f32 %v657
    %v659 = vld [vmem:[#allocation7] sm:$0xff]
    %v660 = vld [vmem:[#allocation7 + $0x8] sm:$0xff]
    %vm661 = vcmask 130048
    %v663 = vsel %vm661, %v658, 0
    %665 = vmatpush.msra.mxu0 0.0
    %666 = vmatpush.msra.mxu0 0.0
    %667 = vmatpush.msra.mxu0 0.0
    %668 = vmatpush.msra.mxu0 0.0
    %669 = vmatpush.msra.mxu0 0.0
    %670 = vmatpush.msra.mxu0 0.0
    %671 = vmatpush.msra.mxu0 0.0
    %672 = vmatpush.msra.mxu0 0.0
    %673 = vmatpush.msra.mxu0 0.0
    %674 = vmatpush.msra.mxu0 0.0
    %675 = vmatpush.msra.mxu0 0.0
    %676 = vmatpush.msra.mxu0 0.0
    %677 = vmatpush.msra.mxu0 0.0
    %678 = vmatpush.msra.mxu0 0.0
    %679 = vmatpush.msra.mxu0 %v660
    %680 = vmatpush.msra.mxu0 %v659
    %681 = vmatmul.f32.gmra.mxu0 %v663
    %v682 = vpop.f32.mrf.mxu0
    %v683 = vadd.f32 0.0, %v682
    %684 = vdwg.mxu0
    %v685 = vld [vmem:[%s6] sm:$0xff]
    %v686 = vld [vmem:[%s6 + $0x8] sm:$0xff]
    %v687 = vld [vmem:[%s6 + $0x10] sm:$0xff]
    %v688 = vld [vmem:[%s6 + $0x18] sm:$0xff]
    %v690 = vsel %vm157, %v683, 0
    %692 = vmatpush.msra.mxu0 0.0
    %693 = vmatpush.msra.mxu0 0.0
    %694 = vmatpush.msra.mxu0 0.0
    %695 = vmatpush.msra.mxu0 0.0
    %696 = vmatpush.msra.mxu0 0.0
    %697 = vmatpush.msra.mxu0 0.0
    %698 = vmatpush.msra.mxu0 0.0
    %699 = vmatpush.msra.mxu0 0.0
    %700 = vmatpush.msra.mxu0 0.0
    %701 = vmatpush.msra.mxu0 0.0
    %702 = vmatpush.msra.mxu0 0.0
    %703 = vmatpush.msra.mxu0 0.0
    %704 = vmatpush.msra.mxu0 %v688
    %705 = vmatpush.msra.mxu0 %v687
    %706 = vmatpush.msra.mxu0 %v686
    %707 = vmatpush.msra.mxu0 %v685
    %708 = vmatmul.f32.gmra.mxu0 %v690
    %v709 = vpop.f32.mrf.mxu0
    %v710 = vadd.f32 %v219, %v709
    %711 = vdwg.mxu0
    %v712 = vxor.u32 %v710, 2147483648
    %v713 = vmul.f32 %v712, 1.442695
    %v714 = vpow.pop %v713
    %v715 = vadd.f32 %v714, 1.0
    %v716 = vrcp.pop %v715
    %v717 = vmul.f32 %v715, %v716
    %v718 = vsub.f32 1.0, %v717
    %v719 = vmul.f32 %v716, %v718
    %v720 = vadd.f32 %v716, %v719
    %vm721 = vweird.f32 %v715
    %vm722 = vweird.f32 %v716
    %vm723 = vmor %vm721, %vm722
    %v724 = vsel %vm723, %v716, %v720
    %v725 = vand.u32 2147483647, %v715
    %vm726 = vcmp.eq.f32.partialorder %v725, 8.507059e+37
    %v727 = vand.u32 %v715, 2147483648
    %v728 = vor.u32 1.1754944e-38, %v727
    %v729 = vsel %vm726, %v728, %v724
    %v730 = vmul.f32 1.0, %v729
    %v731 = vtanh.pop %v710
    %v732 = vld [vmem:[%s3] sm:$0x3]
    %734 = vrot.lane.b32.xlu0 %v732, 32
    %v735 = vpop.permute.xlu0 %734
    %v737 = vmul.f32 %v730, %v735
    %739 = vrot.lane.b32.xlu0 %v731, 64
    %v740 = vpop.permute.xlu0 %739
    %v742 = vmul.f32 %v730, %v740
    %744 = vrot.lane.b32.xlu0 %v742, 32
    %v745 = vpop.permute.xlu0 %744
    %v747 = vadd.f32 %v737, %v745
    %v748 = vtanh.pop %v747
    %750 = vrot.lane.b32.xlu0 %v748, 64
    %v751 = vpop.permute.xlu0 %750
    %v753 = vmul.f32 %v730, %v751
    %v754 = vld [vmem:[%s11] sm:$0xff]
    %v755 = vld [vmem:[%s11 + $0x8] sm:$0xff]
    %v756 = vld [vmem:[%s11 + $0x10] sm:$0xff]
    %v757 = vld [vmem:[%s11 + $0x18] sm:$0xff]
    %v758 = vld [vmem:[#allocation12] sm:$0x1]
    %v760 = vperm.slane %v758, 0
    %763 = vrot.lane.b32.xlu0 %v753, 32
    %v764 = vpop.permute.xlu0 %763
    %v765 = vsel %vm157, %v764, 0
    %767 = vmatpush.msra.mxu0 0.0
    %768 = vmatpush.msra.mxu0 0.0
    %769 = vmatpush.msra.mxu0 0.0
    %770 = vmatpush.msra.mxu0 0.0
    %771 = vmatpush.msra.mxu0 0.0
    %772 = vmatpush.msra.mxu0 0.0
    %773 = vmatpush.msra.mxu0 0.0
    %774 = vmatpush.msra.mxu0 0.0
    %775 = vmatpush.msra.mxu0 0.0
    %776 = vmatpush.msra.mxu0 0.0
    %777 = vmatpush.msra.mxu0 0.0
    %778 = vmatpush.msra.mxu0 0.0
    %779 = vmatpush.msra.mxu0 %v757
    %780 = vmatpush.msra.mxu0 %v756
    %781 = vmatpush.msra.mxu0 %v755
    %782 = vmatpush.msra.mxu0 %v754
    %783 = vmatmul.f32.gmra.mxu0 %v765
    %v784 = vpop.f32.mrf.mxu0
    %v785 = vadd.f32 %v760, %v784
    %786 = vdwg.mxu0
    %v787 = vld [vmem:[#allocation2] sm:$0xff]
    %v788 = vld [vmem:[#allocation2 + $0x8] sm:$0xff]
    %v790 = vrot.slane %v785, 1
    %v791 = vperm.slane %v785, 0
    %v792 = vperm.slane %v790, 0
    %v795 = vadd.f32 %v787, %v791
    %v796 = vadd.f32 %v788, %v792
    %v797 = vtanh.pop %v795
    %v798 = vtanh.pop %v796
    %v799 = vld [vmem:[%s13] sm:$0xff]
    %v800 = vld [vmem:[%s13 + $0x8] sm:$0xff]
    %v801 = vld [vmem:[%s13 + $0x10] sm:$0xff]
    %v802 = vld [vmem:[%s13 + $0x18] sm:$0xff]
    %v804 = vsel %vm157, %v797, 0
    %v807 = vsel %vm157, %v798, 0
    %809 = vmatpush.msra.mxu0 0.0
    %810 = vmatpush.msra.mxu0 0.0
    %811 = vmatpush.msra.mxu0 0.0
    %812 = vmatpush.msra.mxu0 0.0
    %813 = vmatpush.msra.mxu0 0.0
    %814 = vmatpush.msra.mxu0 0.0
    %815 = vmatpush.msra.mxu0 0.0
    %816 = vmatpush.msra.mxu0 0.0
    %817 = vmatpush.msra.mxu0 0.0
    %818 = vmatpush.msra.mxu0 0.0
    %819 = vmatpush.msra.mxu0 0.0
    %820 = vmatpush.msra.mxu0 0.0
    %821 = vmatpush.msra.mxu0 %v802
    %822 = vmatpush.msra.mxu0 %v801
    %823 = vmatpush.msra.mxu0 %v800
    %824 = vmatpush.msra.mxu0 %v799
    %825 = vmatmul.f32.gmra.mxu0 %v804
    %v826 = vpop.f32.mrf.mxu0
    %v827 = vadd.f32 0.0, %v826
    %828 = vmatmul.f32.gmra.mxu0 %v807
    %v829 = vpop.f32.mrf.mxu0
    %v830 = vadd.f32 0.0, %v829
    %831 = vdwg.mxu0
    %v832 = vadd.f32 %v827, %v393
    %v833 = vadd.f32 %v830, %v400
    %836 = vset.pattern.permute.xlu0 0
    %837 = vperm.xlu0 %836, %v832
    %v838 = vpop.permute.xlu0 %837
    %839 = vset.pattern.permute.xlu0 0
    %840 = vperm.xlu0 %839, %v833
    %v841 = vpop.permute.xlu0 %840
    %v842 = vperm.slane %v838, %v222
    %v843 = vperm.slane %v841, %v222
    %v844 = vsel %vm415, %v843, %v842
    %v846 = vsel %vm418, %v844, -inf
    %847 = vmax.xlane.f32.xlu0 %v846
    %v848 = vpop.xlane.xlu0 %847
    %v850 = vperm.slane %v848, 0
    %v851 = vperm.slane %v848, 1
    %v854 = vsub.f32 %v832, %v850
    %v855 = vsub.f32 %v833, %v851
    %v856 = vmul.f32 %v854, 1.442695
    %v857 = vpow.pop %v856
    %v858 = vmul.f32 %v855, 1.442695
    %v859 = vpow.pop %v858
    %862 = vset.pattern.permute.xlu0 0
    %863 = vperm.xlu0 %862, %v857
    %v864 = vpop.permute.xlu0 %863
    %865 = vset.pattern.permute.xlu0 0
    %866 = vperm.xlu0 %865, %v859
    %v867 = vpop.permute.xlu0 %866
    %v868 = vperm.slane %v864, %v222
    %v869 = vperm.slane %v867, %v222
    %v870 = vsel %vm415, %v869, %v868
    %v872 = vsel %vm418, %v870, 0.0
    %873 = vadd.xlane.f32.xlu0 %v872
    %v874 = vpop.xlane.xlu0 %873
    %v876 = vperm.slane %v874, 0
    %v877 = vperm.slane %v874, 1
    %v880 = vrcp.pop %v876
    %v881 = vmul.f32 %v876, %v880
    %v882 = vsub.f32 1.0, %v881
    %v883 = vmul.f32 %v880, %v882
    %v884 = vadd.f32 %v880, %v883
    %vm885 = vweird.f32 %v876
    %vm886 = vweird.f32 %v880
    %vm887 = vmor %vm885, %vm886
    %v888 = vsel %vm887, %v880, %v884
    %v889 = vand.u32 2147483647, %v876
    %vm890 = vcmp.eq.f32.partialorder %v889, 8.507059e+37
    %v891 = vand.u32 %v876, 2147483648
    %v892 = vor.u32 1.1754944e-38, %v891
    %v893 = vsel %vm890, %v892, %v888
    %v894 = vmul.f32 %v857, %v893
    %v895 = vrcp.pop %v877
    %v896 = vmul.f32 %v877, %v895
    %v897 = vsub.f32 1.0, %v896
    %v898 = vmul.f32 %v895, %v897
    %v899 = vadd.f32 %v895, %v898
    %vm900 = vweird.f32 %v877
    %vm901 = vweird.f32 %v895
    %vm902 = vmor %vm900, %vm901
    %v903 = vsel %vm902, %v895, %v899
    %v904 = vand.u32 2147483647, %v877
    %vm905 = vcmp.eq.f32.partialorder %v904, 8.507059e+37
    %v906 = vand.u32 %v877, 2147483648
    %v907 = vor.u32 1.1754944e-38, %v906
    %v908 = vsel %vm905, %v907, %v903
    %v909 = vmul.f32 %v859, %v908
    %912 = vset.pattern.permute.xlu0 0
    %913 = vperm.xlu0 %912, %v894
    %v914 = vpop.permute.xlu0 %913
    %915 = vset.pattern.permute.xlu0 0
    %916 = vperm.xlu0 %915, %v909
    %v917 = vpop.permute.xlu0 %916
    %v918 = vperm.slane %v914, %v222
    %v919 = vperm.slane %v917, %v222
    %922 = vst.msk [vmem:[#allocation16 + $0x1] sm:$0x1] %vm495, %v918
    %923 = vst.msk [vmem:[#allocation16 + $0x5] sm:$0x1] %vm495, %v919
    %v924 = vld [vmem:[%s4] sm:$0xff]
    %v925 = vld [vmem:[%s4 + $0x8] sm:$0xff]
    %v926 = vsel %vm500, %v918, 0
    %928 = vmatpush.msra.mxu0 0.0
    %929 = vmatpush.msra.mxu0 0.0
    %930 = vmatpush.msra.mxu0 0.0
    %931 = vmatpush.msra.mxu0 0.0
    %932 = vmatpush.msra.mxu0 0.0
    %933 = vmatpush.msra.mxu0 0.0
    %934 = vmatpush.msra.mxu0 0.0
    %935 = vmatpush.msra.mxu0 0.0
    %936 = vmatpush.msra.mxu0 0.0
    %937 = vmatpush.msra.mxu0 0.0
    %938 = vmatpush.msra.mxu0 0.0
    %939 = vmatpush.msra.mxu0 0.0
    %940 = vmatpush.msra.mxu0 0.0
    %941 = vmatpush.msra.mxu0 0.0
    %942 = vmatpush.msra.mxu0 0.0
    %943 = vmatpush.msra.mxu0 %v924
    %944 = vmatmul.f32.gmra.mxu0 %v926
    %v945 = vpop.f32.mrf.mxu0
    %v946 = vadd.f32 0.0, %v945
    %947 = vdwg.mxu0
    %v948 = vsel %vm500, %v919, 0
    %950 = vmatpush.msra.mxu0 0.0
    %951 = vmatpush.msra.mxu0 0.0
    %952 = vmatpush.msra.mxu0 0.0
    %953 = vmatpush.msra.mxu0 0.0
    %954 = vmatpush.msra.mxu0 0.0
    %955 = vmatpush.msra.mxu0 0.0
    %956 = vmatpush.msra.mxu0 0.0
    %957 = vmatpush.msra.mxu0 0.0
    %958 = vmatpush.msra.mxu0 0.0
    %959 = vmatpush.msra.mxu0 0.0
    %960 = vmatpush.msra.mxu0 0.0
    %961 = vmatpush.msra.mxu0 0.0
    %962 = vmatpush.msra.mxu0 0.0
    %963 = vmatpush.msra.mxu0 0.0
    %964 = vmatpush.msra.mxu0 0.0
    %965 = vmatpush.msra.mxu0 %v925
    %966 = vmatmul.f32.gmra.mxu0 %v948
    %v967 = vpop.f32.mrf.mxu0
    %v968 = vadd.f32 0.0, %v967
    %969 = vdwg.mxu0
    %v970 = vld [vmem:[%s15] sm:$0xff]
    %v971 = vld [vmem:[%s15 + $0x8] sm:$0xff]
    %v972 = vld [vmem:[%s15 + $0x10] sm:$0xff]
    %v973 = vld [vmem:[%s15 + $0x18] sm:$0xff]
    %v974 = vld [vmem:[%s549] sm:$0xff]
    %v975 = vld [vmem:[%s549 + $0x8] sm:$0xff]
    %v976 = vld [vmem:[%s549 + $0x10] sm:$0xff]
    %v977 = vld [vmem:[%s549 + $0x18] sm:$0xff]
    %978 = vmatpush.msra.mxu0 0.0
    %979 = vmatpush.msra.mxu0 0.0
    %980 = vmatpush.msra.mxu0 0.0
    %981 = vmatpush.msra.mxu0 0.0
    %982 = vmatpush.msra.mxu0 0.0
    %983 = vmatpush.msra.mxu0 0.0
    %984 = vmatpush.msra.mxu0 0.0
    %985 = vmatpush.msra.mxu0 0.0
    %986 = vmatpush.msra.mxu0 0.0
    %987 = vmatpush.msra.mxu0 0.0
    %988 = vmatpush.msra.mxu0 0.0
    %989 = vmatpush.msra.mxu0 0.0
    %990 = vmatpush.msra.mxu0 %v977
    %991 = vmatpush.msra.mxu0 %v976
    %992 = vmatpush.msra.mxu0 %v975
    %993 = vmatpush.msra.mxu0 %v974
    %994 = vmatmul.f32.gmra.mxu0 %v765
    %v995 = vpop.f32.mrf.mxu0
    %v996 = vadd.f32 0.0, %v995
    %997 = vdwg.mxu0
    %v1000 = vrot.slane %v968, 7
    %v1001 = vsel %vm415, %v1000, %v946
    %v1002 = vsel %vm157, %v1001, 0
    %1004 = vmatpush.msra.mxu0 0.0
    %1005 = vmatpush.msra.mxu0 0.0
    %1006 = vmatpush.msra.mxu0 0.0
    %1007 = vmatpush.msra.mxu0 0.0
    %1008 = vmatpush.msra.mxu0 0.0
    %1009 = vmatpush.msra.mxu0 0.0
    %1010 = vmatpush.msra.mxu0 0.0
    %1011 = vmatpush.msra.mxu0 0.0
    %1012 = vmatpush.msra.mxu0 0.0
    %1013 = vmatpush.msra.mxu0 0.0
    %1014 = vmatpush.msra.mxu0 0.0
    %1015 = vmatpush.msra.mxu0 0.0
    %1016 = vmatpush.msra.mxu0 %v973
    %1017 = vmatpush.msra.mxu0 %v972
    %1018 = vmatpush.msra.mxu0 %v971
    %1019 = vmatpush.msra.mxu0 %v970
    %1020 = vmatmul.f32.gmra.mxu0 %v1002
    %v1021 = vpop.f32.mrf.mxu0
    %v1022 = vadd.f32 %v996, %v1021
    %1023 = vdwg.mxu0
    %v1024 = vld [vmem:[#allocation13] sm:$0x1]
    %v1026 = vperm.slane %v1024, 0
    %v1028 = vadd.f32 %v1022, %v1026
    %v1029 = vsel %vm605, %v1028, -inf
    %1030 = vmax.xlane.f32.xlu0 %v1029
    %v1031 = vpop.xlane.xlu0 %1030
    %vm1032 = vcmp.eq.f32.partialorder %v1028, %v1031
    %v1033 = vsel %vm1032, %v222, 16
    %v1034 = vsel %vm605, %v1033, 2147483647
    %v1035 = vand.u32 %v1034, 65535
    %v1036 = vshra.s32 %v1034, 16
    %v1037 = vcvt.s32.f32 %v1035
    %v1038 = vcvt.s32.f32 %v1036
    %1039 = vmin.xlane.f32.xlu0 %v1038
    %v1040 = vpop.xlane.xlu0 %1039
    %vm1041 = vcmp.eq.f32.partialorder %v1038, %v1040
    %v1042 = vsel %vm1041, %v1037, inf
    %1043 = vmin.xlane.f32.xlu0 %v1042
    %v1044 = vpop.xlane.xlu0 %1043
    %v1045 = vcvt.f32.s32 %v1044
    %v1046 = vcvt.f32.s32 %v1040
    %v1047 = vshll.u32 %v1046, 16
    %v1048 = vadd.s32 %v1047, %v1045
    %v1049 = vsub.f32 %v1028, %v1031
    %v1050 = vmul.f32 %v1049, 1.442695
    %v1051 = vpow.pop %v1050
    %v1052 = vsel %vm605, %v1051, 0.0
    %1053 = vadd.xlane.f32.xlu0 %v1052
    %v1054 = vpop.xlane.xlu0 %1053
    %v1055 = vlog2.pop %v1054
    %v1056 = vmul.f32 %v1055, 0.6931472
    %v1057 = vsub.f32 %v634, %v1056
    %v1058 = vmul.f32 %v1051, %v1049
    %v1059 = vsel %vm605, %v1058, 0.0
    %1060 = vadd.xlane.f32.xlu0 %v1059
    %v1061 = vpop.xlane.xlu0 %1060
    %v1062 = vrcp.pop %v1054
    %v1063 = vmul.f32 %v1054, %v1062
    %v1064 = vsub.f32 1.0, %v1063
    %v1065 = vmul.f32 %v1062, %v1064
    %v1066 = vadd.f32 %v1062, %v1065
    %vm1067 = vweird.f32 %v1054
    %vm1068 = vweird.f32 %v1062
    %vm1069 = vmor %vm1067, %vm1068
    %v1070 = vsel %vm1069, %v1062, %v1066
    %v1071 = vand.u32 2147483647, %v1054
    %vm1072 = vcmp.eq.f32.partialorder %v1071, 8.507059e+37
    %v1073 = vand.u32 %v1054, 2147483648
    %v1074 = vor.u32 1.1754944e-38, %v1073
    %v1075 = vsel %vm1072, %v1074, %v1070
    %v1076 = vmul.f32 %v1061, %v1075
    %v1077 = vsub.f32 %v1076, %v1056
    %v1078 = vadd.f32 %v655, %v1077
    %vm1079 = vcmp.eq.s32.totalorder %v222, %v1048
    %v1080 = vsel %vm1079, 1, 0
    %v1081 = vcvt.s32.f32 %v1080
    %v1082 = vld [vmem:[#allocation7] sm:$0xff]
    %v1083 = vld [vmem:[#allocation7 + $0x8] sm:$0xff]
    %v1085 = vsel %vm661, %v1081, 0
    %1087 = vmatpush.msra.mxu0 0.0
    %1088 = vmatpush.msra.mxu0 0.0
    %1089 = vmatpush.msra.mxu0 0.0
    %1090 = vmatpush.msra.mxu0 0.0
    %1091 = vmatpush.msra.mxu0 0.0
    %1092 = vmatpush.msra.mxu0 0.0
    %1093 = vmatpush.msra.mxu0 0.0
    %1094 = vmatpush.msra.mxu0 0.0
    %1095 = vmatpush.msra.mxu0 0.0
    %1096 = vmatpush.msra.mxu0 0.0
    %1097 = vmatpush.msra.mxu0 0.0
    %1098 = vmatpush.msra.mxu0 0.0
    %1099 = vmatpush.msra.mxu0 0.0
    %1100 = vmatpush.msra.mxu0 0.0
    %1101 = vmatpush.msra.mxu0 %v1083
    %1102 = vmatpush.msra.mxu0 %v1082
    %1103 = vmatmul.f32.gmra.mxu0 %v1085
    %v1104 = vpop.f32.mrf.mxu0
    %v1105 = vadd.f32 0.0, %v1104
    %1106 = vdwg.mxu0
    %v1107 = vld [vmem:[%s6] sm:$0xff]
    %v1108 = vld [vmem:[%s6 + $0x8] sm:$0xff]
    %v1109 = vld [vmem:[%s6 + $0x10] sm:$0xff]
    %v1110 = vld [vmem:[%s6 + $0x18] sm:$0xff]
    %v1112 = vsel %vm157, %v1105, 0
    %1114 = vmatpush.msra.mxu0 0.0
    %1115 = vmatpush.msra.mxu0 0.0
    %1116 = vmatpush.msra.mxu0 0.0
    %1117 = vmatpush.msra.mxu0 0.0
    %1118 = vmatpush.msra.mxu0 0.0
    %1119 = vmatpush.msra.mxu0 0.0
    %1120 = vmatpush.msra.mxu0 0.0
    %1121 = vmatpush.msra.mxu0 0.0
    %1122 = vmatpush.msra.mxu0 0.0
    %1123 = vmatpush.msra.mxu0 0.0
    %1124 = vmatpush.msra.mxu0 0.0
    %1125 = vmatpush.msra.mxu0 0.0
    %1126 = vmatpush.msra.mxu0 %v1110
    %1127 = vmatpush.msra.mxu0 %v1109
    %1128 = vmatpush.msra.mxu0 %v1108
    %1129 = vmatpush.msra.mxu0 %v1107
    %1130 = vmatmul.f32.gmra.mxu0 %v1112
    %v1131 = vpop.f32.mrf.mxu0
    %v1132 = vadd.f32 %v219, %v1131
    %1133 = vdwg.mxu0
    %v1134 = vxor.u32 %v1132, 2147483648
    %v1135 = vmul.f32 %v1134, 1.442695
    %v1136 = vpow.pop %v1135
    %v1137 = vadd.f32 %v1136, 1.0
    %v1138 = vrcp.pop %v1137
    %v1139 = vmul.f32 %v1137, %v1138
    %v1140 = vsub.f32 1.0, %v1139
    %v1141 = vmul.f32 %v1138, %v1140
    %v1142 = vadd.f32 %v1138, %v1141
    %vm1143 = vweird.f32 %v1137
    %vm1144 = vweird.f32 %v1138
    %vm1145 = vmor %vm1143, %vm1144
    %v1146 = vsel %vm1145, %v1138, %v1142
    %v1147 = vand.u32 2147483647, %v1137
    %vm1148 = vcmp.eq.f32.partialorder %v1147, 8.507059e+37
    %v1149 = vand.u32 %v1137, 2147483648
    %v1150 = vor.u32 1.1754944e-38, %v1149
    %v1151 = vsel %vm1148, %v1150, %v1146
    %v1152 = vmul.f32 1.0, %v1151
    %v1153 = vtanh.pop %v1132
    %v1154 = vld [vmem:[%s3] sm:$0x3]
    %1156 = vrot.lane.b32.xlu0 %v1154, 32
    %v1157 = vpop.permute.xlu0 %1156
    %v1159 = vmul.f32 %v1152, %v1157
    %1161 = vrot.lane.b32.xlu0 %v1153, 64
    %v1162 = vpop.permute.xlu0 %1161
    %v1164 = vmul.f32 %v1152, %v1162
    %1166 = vrot.lane.b32.xlu0 %v1164, 32
    %v1167 = vpop.permute.xlu0 %1166
    %v1169 = vadd.f32 %v1159, %v1167
    %v1170 = vtanh.pop %v1169
    %1172 = vrot.lane.b32.xlu0 %v1170, 64
    %v1173 = vpop.permute.xlu0 %1172
    %v1175 = vmul.f32 %v1152, %v1173
    %v1176 = vld [vmem:[%s11] sm:$0xff]
    %v1177 = vld [vmem:[%s11 + $0x8] sm:$0xff]
    %v1178 = vld [vmem:[%s11 + $0x10] sm:$0xff]
    %v1179 = vld [vmem:[%s11 + $0x18] sm:$0xff]
    %v1180 = vld [vmem:[#allocation12] sm:$0x1]
    %v1182 = vperm.slane %v1180, 0
    %1185 = vrot.lane.b32.xlu0 %v1175, 32
    %v1186 = vpop.permute.xlu0 %1185
    %v1187 = vsel %vm157, %v1186, 0
    %1189 = vmatpush.msra.mxu0 0.0
    %1190 = vmatpush.msra.mxu0 0.0
    %1191 = vmatpush.msra.mxu0 0.0
    %1192 = vmatpush.msra.mxu0 0.0
    %1193 = vmatpush.msra.mxu0 0.0
    %1194 = vmatpush.msra.mxu0 0.0
    %1195 = vmatpush.msra.mxu0 0.0
    %1196 = vmatpush.msra.mxu0 0.0
    %1197 = vmatpush.msra.mxu0 0.0
    %1198 = vmatpush.msra.mxu0 0.0
    %1199 = vmatpush.msra.mxu0 0.0
    %1200 = vmatpush.msra.mxu0 0.0
    %1201 = vmatpush.msra.mxu0 %v1179
    %1202 = vmatpush.msra.mxu0 %v1178
    %1203 = vmatpush.msra.mxu0 %v1177
    %1204 = vmatpush.msra.mxu0 %v1176
    %1205 = vmatmul.f32.gmra.mxu0 %v1187
    %v1206 = vpop.f32.mrf.mxu0
    %v1207 = vadd.f32 %v1182, %v1206
    %1208 = vdwg.mxu0
    %v1209 = vld [vmem:[#allocation2] sm:$0xff]
    %v1210 = vld [vmem:[#allocation2 + $0x8] sm:$0xff]
    %v1212 = vrot.slane %v1207, 1
    %v1213 = vperm.slane %v1207, 0
    %v1214 = vperm.slane %v1212, 0
    %v1217 = vadd.f32 %v1209, %v1213
    %v1218 = vadd.f32 %v1210, %v1214
    %v1219 = vtanh.pop %v1217
    %v1220 = vtanh.pop %v1218
    %v1221 = vld [vmem:[%s13] sm:$0xff]
    %v1222 = vld [vmem:[%s13 + $0x8] sm:$0xff]
    %v1223 = vld [vmem:[%s13 + $0x10] sm:$0xff]
    %v1224 = vld [vmem:[%s13 + $0x18] sm:$0xff]
    %v1226 = vsel %vm157, %v1219, 0
    %v1229 = vsel %vm157, %v1220, 0
    %1231 = vmatpush.msra.mxu0 0.0
    %1232 = vmatpush.msra.mxu0 0.0
    %1233 = vmatpush.msra.mxu0 0.0
    %1234 = vmatpush.msra.mxu0 0.0
    %1235 = vmatpush.msra.mxu0 0.0
    %1236 = vmatpush.msra.mxu0 0.0
    %1237 = vmatpush.msra.mxu0 0.0
    %1238 = vmatpush.msra.mxu0 0.0
    %1239 = vmatpush.msra.mxu0 0.0
    %1240 = vmatpush.msra.mxu0 0.0
    %1241 = vmatpush.msra.mxu0 0.0
    %1242 = vmatpush.msra.mxu0 0.0
    %1243 = vmatpush.msra.mxu0 %v1224
    %1244 = vmatpush.msra.mxu0 %v1223
    %1245 = vmatpush.msra.mxu0 %v1222
    %1246 = vmatpush.msra.mxu0 %v1221
    %1247 = vmatmul.f32.gmra.mxu0 %v1226
    %v1248 = vpop.f32.mrf.mxu0
    %v1249 = vadd.f32 0.0, %v1248
    %1250 = vmatmul.f32.gmra.mxu0 %v1229
    %v1251 = vpop.f32.mrf.mxu0
    %v1252 = vadd.f32 0.0, %v1251
    %1253 = vdwg.mxu0
    %v1254 = vadd.f32 %v1249, %v393
    %v1255 = vadd.f32 %v1252, %v400
    %1258 = vset.pattern.permute.xlu0 0
    %1259 = vperm.xlu0 %1258, %v1254
    %v1260 = vpop.permute.xlu0 %1259
    %1261 = vset.pattern.permute.xlu0 0
    %1262 = vperm.xlu0 %1261, %v1255
    %v1263 = vpop.permute.xlu0 %1262
    %v1264 = vperm.slane %v1260, %v222
    %v1265 = vperm.slane %v1263, %v222
    %v1266 = vsel %vm415, %v1265, %v1264
    %v1268 = vsel %vm418, %v1266, -inf
    %1269 = vmax.xlane.f32.xlu0 %v1268
    %v1270 = vpop.xlane.xlu0 %1269
    %v1272 = vperm.slane %v1270, 0
    %v1273 = vperm.slane %v1270, 1
    %v1276 = vsub.f32 %v1254, %v1272
    %v1277 = vsub.f32 %v1255, %v1273
    %v1278 = vmul.f32 %v1276, 1.442695
    %v1279 = vpow.pop %v1278
    %v1280 = vmul.f32 %v1277, 1.442695
    %v1281 = vpow.pop %v1280
    %1284 = vset.pattern.permute.xlu0 0
    %1285 = vperm.xlu0 %1284, %v1279
    %v1286 = vpop.permute.xlu0 %1285
    %1287 = vset.pattern.permute.xlu0 0
    %1288 = vperm.xlu0 %1287, %v1281
    %v1289 = vpop.permute.xlu0 %1288
    %v1290 = vperm.slane %v1286, %v222
    %v1291 = vperm.slane %v1289, %v222
    %v1292 = vsel %vm415, %v1291, %v1290
    %v1294 = vsel %vm418, %v1292, 0.0
    %1295 = vadd.xlane.f32.xlu0 %v1294
    %v1296 = vpop.xlane.xlu0 %1295
    %v1298 = vperm.slane %v1296, 0
    %v1299 = vperm.slane %v1296, 1
    %v1302 = vrcp.pop %v1298
    %v1303 = vmul.f32 %v1298, %v1302
    %v1304 = vsub.f32 1.0, %v1303
    %v1305 = vmul.f32 %v1302, %v1304
    %v1306 = vadd.f32 %v1302, %v1305
    %vm1307 = vweird.f32 %v1298
    %vm1308 = vweird.f32 %v1302
    %vm1309 = vmor %vm1307, %vm1308
    %v1310 = vsel %vm1309, %v1302, %v1306
    %v1311 = vand.u32 2147483647, %v1298
    %vm1312 = vcmp.eq.f32.partialorder %v1311, 8.507059e+37
    %v1313 = vand.u32 %v1298, 2147483648
    %v1314 = vor.u32 1.1754944e-38, %v1313
    %v1315 = vsel %vm1312, %v1314, %v1310
    %v1316 = vmul.f32 %v1279, %v1315
    %v1317 = vrcp.pop %v1299
    %v1318 = vmul.f32 %v1299, %v1317
    %v1319 = vsub.f32 1.0, %v1318
    %v1320 = vmul.f32 %v1317, %v1319
    %v1321 = vadd.f32 %v1317, %v1320
    %vm1322 = vweird.f32 %v1299
    %vm1323 = vweird.f32 %v1317
    %vm1324 = vmor %vm1322, %vm1323
    %v1325 = vsel %vm1324, %v1317, %v1321
    %v1326 = vand.u32 2147483647, %v1299
    %vm1327 = vcmp.eq.f32.partialorder %v1326, 8.507059e+37
    %v1328 = vand.u32 %v1299, 2147483648
    %v1329 = vor.u32 1.1754944e-38, %v1328
    %v1330 = vsel %vm1327, %v1329, %v1325
    %v1331 = vmul.f32 %v1281, %v1330
    %1334 = vset.pattern.permute.xlu0 0
    %1335 = vperm.xlu0 %1334, %v1316
    %v1336 = vpop.permute.xlu0 %1335
    %1337 = vset.pattern.permute.xlu0 0
    %1338 = vperm.xlu0 %1337, %v1331
    %v1339 = vpop.permute.xlu0 %1338
    %v1340 = vperm.slane %v1336, %v222
    %v1341 = vperm.slane %v1339, %v222
    %1344 = vst.msk [vmem:[#allocation16 + $0x2] sm:$0x1] %vm495, %v1340
    %1345 = vst.msk [vmem:[#allocation16 + $0x6] sm:$0x1] %vm495, %v1341
    %v1346 = vld [vmem:[%s4] sm:$0xff]
    %v1347 = vld [vmem:[%s4 + $0x8] sm:$0xff]
    %v1348 = vsel %vm500, %v1340, 0
    %1350 = vmatpush.msra.mxu0 0.0
    %1351 = vmatpush.msra.mxu0 0.0
    %1352 = vmatpush.msra.mxu0 0.0
    %1353 = vmatpush.msra.mxu0 0.0
    %1354 = vmatpush.msra.mxu0 0.0
    %1355 = vmatpush.msra.mxu0 0.0
    %1356 = vmatpush.msra.mxu0 0.0
    %1357 = vmatpush.msra.mxu0 0.0
    %1358 = vmatpush.msra.mxu0 0.0
    %1359 = vmatpush.msra.mxu0 0.0
    %1360 = vmatpush.msra.mxu0 0.0
    %1361 = vmatpush.msra.mxu0 0.0
    %1362 = vmatpush.msra.mxu0 0.0
    %1363 = vmatpush.msra.mxu0 0.0
    %1364 = vmatpush.msra.mxu0 0.0
    %1365 = vmatpush.msra.mxu0 %v1346
    %1366 = vmatmul.f32.gmra.mxu0 %v1348
    %v1367 = vpop.f32.mrf.mxu0
    %v1368 = vadd.f32 0.0, %v1367
    %1369 = vdwg.mxu0
    %v1370 = vsel %vm500, %v1341, 0
    %1372 = vmatpush.msra.mxu0 0.0
    %1373 = vmatpush.msra.mxu0 0.0
    %1374 = vmatpush.msra.mxu0 0.0
    %1375 = vmatpush.msra.mxu0 0.0
    %1376 = vmatpush.msra.mxu0 0.0
    %1377 = vmatpush.msra.mxu0 0.0
    %1378 = vmatpush.msra.mxu0 0.0
    %1379 = vmatpush.msra.mxu0 0.0
    %1380 = vmatpush.msra.mxu0 0.0
    %1381 = vmatpush.msra.mxu0 0.0
    %1382 = vmatpush.msra.mxu0 0.0
    %1383 = vmatpush.msra.mxu0 0.0
    %1384 = vmatpush.msra.mxu0 0.0
    %1385 = vmatpush.msra.mxu0 0.0
    %1386 = vmatpush.msra.mxu0 0.0
    %1387 = vmatpush.msra.mxu0 %v1347
    %1388 = vmatmul.f32.gmra.mxu0 %v1370
    %v1389 = vpop.f32.mrf.mxu0
    %v1390 = vadd.f32 0.0, %v1389
    %1391 = vdwg.mxu0
    %v1392 = vld [vmem:[%s15] sm:$0xff]
    %v1393 = vld [vmem:[%s15 + $0x8] sm:$0xff]
    %v1394 = vld [vmem:[%s15 + $0x10] sm:$0xff]
    %v1395 = vld [vmem:[%s15 + $0x18] sm:$0xff]
    %v1396 = vld [vmem:[%s549] sm:$0xff]
    %v1397 = vld [vmem:[%s549 + $0x8] sm:$0xff]
    %v1398 = vld [vmem:[%s549 + $0x10] sm:$0xff]
    %v1399 = vld [vmem:[%s549 + $0x18] sm:$0xff]
    %1400 = vmatpush.msra.mxu0 0.0
    %1401 = vmatpush.msra.mxu0 0.0
    %1402 = vmatpush.msra.mxu0 0.0
    %1403 = vmatpush.msra.mxu0 0.0
    %1404 = vmatpush.msra.mxu0 0.0
    %1405 = vmatpush.msra.mxu0 0.0
    %1406 = vmatpush.msra.mxu0 0.0
    %1407 = vmatpush.msra.mxu0 0.0
    %1408 = vmatpush.msra.mxu0 0.0
    %1409 = vmatpush.msra.mxu0 0.0
    %1410 = vmatpush.msra.mxu0 0.0
    %1411 = vmatpush.msra.mxu0 0.0
    %1412 = vmatpush.msra.mxu0 %v1399
    %1413 = vmatpush.msra.mxu0 %v1398
    %1414 = vmatpush.msra.mxu0 %v1397
    %1415 = vmatpush.msra.mxu0 %v1396
    %1416 = vmatmul.f32.gmra.mxu0 %v1187
    %v1417 = vpop.f32.mrf.mxu0
    %v1418 = vadd.f32 0.0, %v1417
    %1419 = vdwg.mxu0
    %v1422 = vrot.slane %v1390, 7
    %v1423 = vsel %vm415, %v1422, %v1368
    %v1424 = vsel %vm157, %v1423, 0
    %1426 = vmatpush.msra.mxu0 0.0
    %1427 = vmatpush.msra.mxu0 0.0
    %1428 = vmatpush.msra.mxu0 0.0
    %1429 = vmatpush.msra.mxu0 0.0
    %1430 = vmatpush.msra.mxu0 0.0
    %1431 = vmatpush.msra.mxu0 0.0
    %1432 = vmatpush.msra.mxu0 0.0
    %1433 = vmatpush.msra.mxu0 0.0
    %1434 = vmatpush.msra.mxu0 0.0
    %1435 = vmatpush.msra.mxu0 0.0
    %1436 = vmatpush.msra.mxu0 0.0
    %1437 = vmatpush.msra.mxu0 0.0
    %1438 = vmatpush.msra.mxu0 %v1395
    %1439 = vmatpush.msra.mxu0 %v1394
    %1440 = vmatpush.msra.mxu0 %v1393
    %1441 = vmatpush.msra.mxu0 %v1392
    %1442 = vmatmul.f32.gmra.mxu0 %v1424
    %v1443 = vpop.f32.mrf.mxu0
    %v1444 = vadd.f32 %v1418, %v1443
    %1445 = vdwg.mxu0
    %v1446 = vld [vmem:[#allocation13] sm:$0x1]
    %v1448 = vperm.slane %v1446, 0
    %v1450 = vadd.f32 %v1444, %v1448
    %v1451 = vsel %vm605, %v1450, -inf
    %1452 = vmax.xlane.f32.xlu0 %v1451
    %v1453 = vpop.xlane.xlu0 %1452
    %vm1454 = vcmp.eq.f32.partialorder %v1450, %v1453
    %v1455 = vsel %vm1454, %v222, 16
    %v1456 = vsel %vm605, %v1455, 2147483647
    %v1457 = vand.u32 %v1456, 65535
    %v1458 = vshra.s32 %v1456, 16
    %v1459 = vcvt.s32.f32 %v1457
    %v1460 = vcvt.s32.f32 %v1458
    %1461 = vmin.xlane.f32.xlu0 %v1460
    %v1462 = vpop.xlane.xlu0 %1461
    %vm1463 = vcmp.eq.f32.partialorder %v1460, %v1462
    %v1464 = vsel %vm1463, %v1459, inf
    %1465 = vmin.xlane.f32.xlu0 %v1464
    %v1466 = vpop.xlane.xlu0 %1465
    %v1467 = vcvt.f32.s32 %v1466
    %v1468 = vcvt.f32.s32 %v1462
    %v1469 = vshll.u32 %v1468, 16
    %v1470 = vadd.s32 %v1469, %v1467
    %v1471 = vsub.f32 %v1450, %v1453
    %v1472 = vmul.f32 %v1471, 1.442695
    %v1473 = vpow.pop %v1472
    %v1474 = vsel %vm605, %v1473, 0.0
    %1475 = vadd.xlane.f32.xlu0 %v1474
    %v1476 = vpop.xlane.xlu0 %1475
    %v1477 = vlog2.pop %v1476
    %v1478 = vmul.f32 %v1477, 0.6931472
    %v1479 = vsub.f32 %v1057, %v1478
    %v1480 = vmul.f32 %v1473, %v1471
    %v1481 = vsel %vm605, %v1480, 0.0
    %1482 = vadd.xlane.f32.xlu0 %v1481
    %v1483 = vpop.xlane.xlu0 %1482
    %v1484 = vrcp.pop %v1476
    %v1485 = vmul.f32 %v1476, %v1484
    %v1486 = vsub.f32 1.0, %v1485
    %v1487 = vmul.f32 %v1484, %v1486
    %v1488 = vadd.f32 %v1484, %v1487
    %vm1489 = vweird.f32 %v1476
    %vm1490 = vweird.f32 %v1484
    %vm1491 = vmor %vm1489, %vm1490
    %v1492 = vsel %vm1491, %v1484, %v1488
    %v1493 = vand.u32 2147483647, %v1476
    %vm1494 = vcmp.eq.f32.partialorder %v1493, 8.507059e+37
    %v1495 = vand.u32 %v1476, 2147483648
    %v1496 = vor.u32 1.1754944e-38, %v1495
    %v1497 = vsel %vm1494, %v1496, %v1492
    %v1498 = vmul.f32 %v1483, %v1497
    %v1499 = vsub.f32 %v1498, %v1478
    %v1500 = vadd.f32 %v1078, %v1499
    %vm1501 = vcmp.eq.s32.totalorder %v222, %v1470
    %v1502 = vsel %vm1501, 1, 0
    %v1503 = vcvt.s32.f32 %v1502
    %v1504 = vld [vmem:[#allocation7] sm:$0xff]
    %v1505 = vld [vmem:[#allocation7 + $0x8] sm:$0xff]
    %v1507 = vsel %vm661, %v1503, 0
    %1509 = vmatpush.msra.mxu0 0.0
    %1510 = vmatpush.msra.mxu0 0.0
    %1511 = vmatpush.msra.mxu0 0.0
    %1512 = vmatpush.msra.mxu0 0.0
    %1513 = vmatpush.msra.mxu0 0.0
    %1514 = vmatpush.msra.mxu0 0.0
    %1515 = vmatpush.msra.mxu0 0.0
    %1516 = vmatpush.msra.mxu0 0.0
    %1517 = vmatpush.msra.mxu0 0.0
    %1518 = vmatpush.msra.mxu0 0.0
    %1519 = vmatpush.msra.mxu0 0.0
    %1520 = vmatpush.msra.mxu0 0.0
    %1521 = vmatpush.msra.mxu0 0.0
    %1522 = vmatpush.msra.mxu0 0.0
    %1523 = vmatpush.msra.mxu0 %v1505
    %1524 = vmatpush.msra.mxu0 %v1504
    %1525 = vmatmul.f32.gmra.mxu0 %v1507
    %v1526 = vpop.f32.mrf.mxu0
    %v1527 = vadd.f32 0.0, %v1526
    %1528 = vdwg.mxu0
    %v1529 = vld [vmem:[%s6] sm:$0xff]
    %v1530 = vld [vmem:[%s6 + $0x8] sm:$0xff]
    %v1531 = vld [vmem:[%s6 + $0x10] sm:$0xff]
    %v1532 = vld [vmem:[%s6 + $0x18] sm:$0xff]
    %v1534 = vsel %vm157, %v1527, 0
    %1536 = vmatpush.msra.mxu0 0.0
    %1537 = vmatpush.msra.mxu0 0.0
    %1538 = vmatpush.msra.mxu0 0.0
    %1539 = vmatpush.msra.mxu0 0.0
    %1540 = vmatpush.msra.mxu0 0.0
    %1541 = vmatpush.msra.mxu0 0.0
    %1542 = vmatpush.msra.mxu0 0.0
    %1543 = vmatpush.msra.mxu0 0.0
    %1544 = vmatpush.msra.mxu0 0.0
    %1545 = vmatpush.msra.mxu0 0.0
    %1546 = vmatpush.msra.mxu0 0.0
    %1547 = vmatpush.msra.mxu0 0.0
    %1548 = vmatpush.msra.mxu0 %v1532
    %1549 = vmatpush.msra.mxu0 %v1531
    %1550 = vmatpush.msra.mxu0 %v1530
    %1551 = vmatpush.msra.mxu0 %v1529
    %1552 = vmatmul.f32.gmra.mxu0 %v1534
    %v1553 = vpop.f32.mrf.mxu0
    %v1554 = vadd.f32 %v219, %v1553
    %1555 = vdwg.mxu0
    %v1556 = vxor.u32 %v1554, 2147483648
    %v1557 = vmul.f32 %v1556, 1.442695
    %v1558 = vpow.pop %v1557
    %v1559 = vadd.f32 %v1558, 1.0
    %v1560 = vrcp.pop %v1559
    %v1561 = vmul.f32 %v1559, %v1560
    %v1562 = vsub.f32 1.0, %v1561
    %v1563 = vmul.f32 %v1560, %v1562
    %v1564 = vadd.f32 %v1560, %v1563
    %vm1565 = vweird.f32 %v1559
    %vm1566 = vweird.f32 %v1560
    %vm1567 = vmor %vm1565, %vm1566
    %v1568 = vsel %vm1567, %v1560, %v1564
    %v1569 = vand.u32 2147483647, %v1559
    %vm1570 = vcmp.eq.f32.partialorder %v1569, 8.507059e+37
    %v1571 = vand.u32 %v1559, 2147483648
    %v1572 = vor.u32 1.1754944e-38, %v1571
    %v1573 = vsel %vm1570, %v1572, %v1568
    %v1574 = vmul.f32 1.0, %v1573
    %v1575 = vtanh.pop %v1554
    %v1576 = vld [vmem:[%s3] sm:$0x3]
    %1578 = vrot.lane.b32.xlu0 %v1576, 32
    %v1579 = vpop.permute.xlu0 %1578
    %v1581 = vmul.f32 %v1574, %v1579
    %1583 = vrot.lane.b32.xlu0 %v1575, 64
    %v1584 = vpop.permute.xlu0 %1583
    %v1586 = vmul.f32 %v1574, %v1584
    %1588 = vrot.lane.b32.xlu0 %v1586, 32
    %v1589 = vpop.permute.xlu0 %1588
    %v1591 = vadd.f32 %v1581, %v1589
    %v1592 = vtanh.pop %v1591
    %1594 = vrot.lane.b32.xlu0 %v1592, 64
    %v1595 = vpop.permute.xlu0 %1594
    %v1597 = vmul.f32 %v1574, %v1595
    %v1598 = vld [vmem:[%s11] sm:$0xff]
    %v1599 = vld [vmem:[%s11 + $0x8] sm:$0xff]
    %v1600 = vld [vmem:[%s11 + $0x10] sm:$0xff]
    %v1601 = vld [vmem:[%s11 + $0x18] sm:$0xff]
    %v1602 = vld [vmem:[#allocation12] sm:$0x1]
    %v1604 = vperm.slane %v1602, 0
    %1607 = vrot.lane.b32.xlu0 %v1597, 32
    %v1608 = vpop.permute.xlu0 %1607
    %v1609 = vsel %vm157, %v1608, 0
    %1611 = vmatpush.msra.mxu0 0.0
    %1612 = vmatpush.msra.mxu0 0.0
    %1613 = vmatpush.msra.mxu0 0.0
    %1614 = vmatpush.msra.mxu0 0.0
    %1615 = vmatpush.msra.mxu0 0.0
    %1616 = vmatpush.msra.mxu0 0.0
    %1617 = vmatpush.msra.mxu0 0.0
    %1618 = vmatpush.msra.mxu0 0.0
    %1619 = vmatpush.msra.mxu0 0.0
    %1620 = vmatpush.msra.mxu0 0.0
    %1621 = vmatpush.msra.mxu0 0.0
    %1622 = vmatpush.msra.mxu0 0.0
    %1623 = vmatpush.msra.mxu0 %v1601
    %1624 = vmatpush.msra.mxu0 %v1600
    %1625 = vmatpush.msra.mxu0 %v1599
    %1626 = vmatpush.msra.mxu0 %v1598
    %1627 = vmatmul.f32.gmra.mxu0 %v1609
    %v1628 = vpop.f32.mrf.mxu0
    %v1629 = vadd.f32 %v1604, %v1628
    %1630 = vdwg.mxu0
    %v1631 = vld [vmem:[#allocation2] sm:$0xff]
    %v1632 = vld [vmem:[#allocation2 + $0x8] sm:$0xff]
    %v1634 = vrot.slane %v1629, 1
    %v1635 = vperm.slane %v1629, 0
    %v1636 = vperm.slane %v1634, 0
    %v1639 = vadd.f32 %v1631, %v1635
    %v1640 = vadd.f32 %v1632, %v1636
    %v1641 = vtanh.pop %v1639
    %v1642 = vtanh.pop %v1640
    %v1643 = vld [vmem:[%s13] sm:$0xff]
    %v1644 = vld [vmem:[%s13 + $0x8] sm:$0xff]
    %v1645 = vld [vmem:[%s13 + $0x10] sm:$0xff]
    %v1646 = vld [vmem:[%s13 + $0x18] sm:$0xff]
    %v1648 = vsel %vm157, %v1641, 0
    %v1651 = vsel %vm157, %v1642, 0
    %1653 = vmatpush.msra.mxu0 0.0
    %1654 = vmatpush.msra.mxu0 0.0
    %1655 = vmatpush.msra.mxu0 0.0
    %1656 = vmatpush.msra.mxu0 0.0
    %1657 = vmatpush.msra.mxu0 0.0
    %1658 = vmatpush.msra.mxu0 0.0
    %1659 = vmatpush.msra.mxu0 0.0
    %1660 = vmatpush.msra.mxu0 0.0
    %1661 = vmatpush.msra.mxu0 0.0
    %1662 = vmatpush.msra.mxu0 0.0
    %1663 = vmatpush.msra.mxu0 0.0
    %1664 = vmatpush.msra.mxu0 0.0
    %1665 = vmatpush.msra.mxu0 %v1646
    %1666 = vmatpush.msra.mxu0 %v1645
    %1667 = vmatpush.msra.mxu0 %v1644
    %1668 = vmatpush.msra.mxu0 %v1643
    %1669 = vmatmul.f32.gmra.mxu0 %v1648
    %v1670 = vpop.f32.mrf.mxu0
    %v1671 = vadd.f32 0.0, %v1670
    %1672 = vmatmul.f32.gmra.mxu0 %v1651
    %v1673 = vpop.f32.mrf.mxu0
    %v1674 = vadd.f32 0.0, %v1673
    %1675 = vdwg.mxu0
    %v1676 = vadd.f32 %v1671, %v393
    %v1677 = vadd.f32 %v1674, %v400
    %1680 = vset.pattern.permute.xlu0 0
    %1681 = vperm.xlu0 %1680, %v1676
    %v1682 = vpop.permute.xlu0 %1681
    %1683 = vset.pattern.permute.xlu0 0
    %1684 = vperm.xlu0 %1683, %v1677
    %v1685 = vpop.permute.xlu0 %1684
    %v1686 = vperm.slane %v1682, %v222
    %v1687 = vperm.slane %v1685, %v222
    %v1688 = vsel %vm415, %v1687, %v1686
    %v1690 = vsel %vm418, %v1688, -inf
    %1691 = vmax.xlane.f32.xlu0 %v1690
    %v1692 = vpop.xlane.xlu0 %1691
    %v1694 = vperm.slane %v1692, 0
    %v1695 = vperm.slane %v1692, 1
    %v1698 = vsub.f32 %v1676, %v1694
    %v1699 = vsub.f32 %v1677, %v1695
    %v1700 = vmul.f32 %v1698, 1.442695
    %v1701 = vpow.pop %v1700
    %v1702 = vmul.f32 %v1699, 1.442695
    %v1703 = vpow.pop %v1702
    %1706 = vset.pattern.permute.xlu0 0
    %1707 = vperm.xlu0 %1706, %v1701
    %v1708 = vpop.permute.xlu0 %1707
    %1709 = vset.pattern.permute.xlu0 0
    %1710 = vperm.xlu0 %1709, %v1703
    %v1711 = vpop.permute.xlu0 %1710
    %v1712 = vperm.slane %v1708, %v222
    %v1713 = vperm.slane %v1711, %v222
    %v1714 = vsel %vm415, %v1713, %v1712
    %v1716 = vsel %vm418, %v1714, 0.0
    %1717 = vadd.xlane.f32.xlu0 %v1716
    %v1718 = vpop.xlane.xlu0 %1717
    %v1720 = vperm.slane %v1718, 0
    %v1721 = vperm.slane %v1718, 1
    %v1724 = vrcp.pop %v1720
    %v1725 = vmul.f32 %v1720, %v1724
    %v1726 = vsub.f32 1.0, %v1725
    %v1727 = vmul.f32 %v1724, %v1726
    %v1728 = vadd.f32 %v1724, %v1727
    %vm1729 = vweird.f32 %v1720
    %vm1730 = vweird.f32 %v1724
    %vm1731 = vmor %vm1729, %vm1730
    %v1732 = vsel %vm1731, %v1724, %v1728
    %v1733 = vand.u32 2147483647, %v1720
    %vm1734 = vcmp.eq.f32.partialorder %v1733, 8.507059e+37
    %v1735 = vand.u32 %v1720, 2147483648
    %v1736 = vor.u32 1.1754944e-38, %v1735
    %v1737 = vsel %vm1734, %v1736, %v1732
    %v1738 = vmul.f32 %v1701, %v1737
    %v1739 = vrcp.pop %v1721
    %v1740 = vmul.f32 %v1721, %v1739
    %v1741 = vsub.f32 1.0, %v1740
    %v1742 = vmul.f32 %v1739, %v1741
    %v1743 = vadd.f32 %v1739, %v1742
    %vm1744 = vweird.f32 %v1721
    %vm1745 = vweird.f32 %v1739
    %vm1746 = vmor %vm1744, %vm1745
    %v1747 = vsel %vm1746, %v1739, %v1743
    %v1748 = vand.u32 2147483647, %v1721
    %vm1749 = vcmp.eq.f32.partialorder %v1748, 8.507059e+37
    %v1750 = vand.u32 %v1721, 2147483648
    %v1751 = vor.u32 1.1754944e-38, %v1750
    %v1752 = vsel %vm1749, %v1751, %v1747
    %v1753 = vmul.f32 %v1703, %v1752
    %1756 = vset.pattern.permute.xlu0 0
    %1757 = vperm.xlu0 %1756, %v1738
    %v1758 = vpop.permute.xlu0 %1757
    %1759 = vset.pattern.permute.xlu0 0
    %1760 = vperm.xlu0 %1759, %v1753
    %v1761 = vpop.permute.xlu0 %1760
    %v1762 = vperm.slane %v1758, %v222
    %v1763 = vperm.slane %v1761, %v222
    %1766 = vst.msk [vmem:[#allocation16 + $0x3] sm:$0x1] %vm495, %v1762
    %1767 = vst.msk [vmem:[#allocation16 + $0x7] sm:$0x1] %vm495, %v1763
    %v1768 = vld [vmem:[%s4] sm:$0xff]
    %v1769 = vld [vmem:[%s4 + $0x8] sm:$0xff]
    %v1770 = vsel %vm500, %v1762, 0
    %1772 = vmatpush.msra.mxu0 0.0
    %1773 = vmatpush.msra.mxu0 0.0
    %1774 = vmatpush.msra.mxu0 0.0
    %1775 = vmatpush.msra.mxu0 0.0
    %1776 = vmatpush.msra.mxu0 0.0
    %1777 = vmatpush.msra.mxu0 0.0
    %1778 = vmatpush.msra.mxu0 0.0
    %1779 = vmatpush.msra.mxu0 0.0
    %1780 = vmatpush.msra.mxu0 0.0
    %1781 = vmatpush.msra.mxu0 0.0
    %1782 = vmatpush.msra.mxu0 0.0
    %1783 = vmatpush.msra.mxu0 0.0
    %1784 = vmatpush.msra.mxu0 0.0
    %1785 = vmatpush.msra.mxu0 0.0
    %1786 = vmatpush.msra.mxu0 0.0
    %1787 = vmatpush.msra.mxu0 %v1768
    %1788 = vmatmul.f32.gmra.mxu0 %v1770
    %v1789 = vpop.f32.mrf.mxu0
    %v1790 = vadd.f32 0.0, %v1789
    %1791 = vdwg.mxu0
    %v1792 = vsel %vm500, %v1763, 0
    %1794 = vmatpush.msra.mxu0 0.0
    %1795 = vmatpush.msra.mxu0 0.0
    %1796 = vmatpush.msra.mxu0 0.0
    %1797 = vmatpush.msra.mxu0 0.0
    %1798 = vmatpush.msra.mxu0 0.0
    %1799 = vmatpush.msra.mxu0 0.0
    %1800 = vmatpush.msra.mxu0 0.0
    %1801 = vmatpush.msra.mxu0 0.0
    %1802 = vmatpush.msra.mxu0 0.0
    %1803 = vmatpush.msra.mxu0 0.0
    %1804 = vmatpush.msra.mxu0 0.0
    %1805 = vmatpush.msra.mxu0 0.0
    %1806 = vmatpush.msra.mxu0 0.0
    %1807 = vmatpush.msra.mxu0 0.0
    %1808 = vmatpush.msra.mxu0 0.0
    %1809 = vmatpush.msra.mxu0 %v1769
    %1810 = vmatmul.f32.gmra.mxu0 %v1792
    %v1811 = vpop.f32.mrf.mxu0
    %v1812 = vadd.f32 0.0, %v1811
    %1813 = vdwg.mxu0
    %v1814 = vld [vmem:[%s15] sm:$0xff]
    %v1815 = vld [vmem:[%s15 + $0x8] sm:$0xff]
    %v1816 = vld [vmem:[%s15 + $0x10] sm:$0xff]
    %v1817 = vld [vmem:[%s15 + $0x18] sm:$0xff]
    %v1818 = vld [vmem:[%s549] sm:$0xff]
    %v1819 = vld [vmem:[%s549 + $0x8] sm:$0xff]
    %v1820 = vld [vmem:[%s549 + $0x10] sm:$0xff]
    %v1821 = vld [vmem:[%s549 + $0x18] sm:$0xff]
    %1822 = vmatpush.msra.mxu0 0.0
    %1823 = vmatpush.msra.mxu0 0.0
    %1824 = vmatpush.msra.mxu0 0.0
    %1825 = vmatpush.msra.mxu0 0.0
    %1826 = vmatpush.msra.mxu0 0.0
    %1827 = vmatpush.msra.mxu0 0.0
    %1828 = vmatpush.msra.mxu0 0.0
    %1829 = vmatpush.msra.mxu0 0.0
    %1830 = vmatpush.msra.mxu0 0.0
    %1831 = vmatpush.msra.mxu0 0.0
    %1832 = vmatpush.msra.mxu0 0.0
    %1833 = vmatpush.msra.mxu0 0.0
    %1834 = vmatpush.msra.mxu0 %v1821
    %1835 = vmatpush.msra.mxu0 %v1820
    %1836 = vmatpush.msra.mxu0 %v1819
    %1837 = vmatpush.msra.mxu0 %v1818
    %1838 = vmatmul.f32.gmra.mxu0 %v1609
    %v1839 = vpop.f32.mrf.mxu0
    %v1840 = vadd.f32 0.0, %v1839
    %1841 = vdwg.mxu0
    %v1844 = vrot.slane %v1812, 7
    %v1845 = vsel %vm415, %v1844, %v1790
    %v1846 = vsel %vm157, %v1845, 0
    %1848 = vmatpush.msra.mxu0 0.0
    %1849 = vmatpush.msra.mxu0 0.0
    %1850 = vmatpush.msra.mxu0 0.0
    %1851 = vmatpush.msra.mxu0 0.0
    %1852 = vmatpush.msra.mxu0 0.0
    %1853 = vmatpush.msra.mxu0 0.0
    %1854 = vmatpush.msra.mxu0 0.0
    %1855 = vmatpush.msra.mxu0 0.0
    %1856 = vmatpush.msra.mxu0 0.0
    %1857 = vmatpush.msra.mxu0 0.0
    %1858 = vmatpush.msra.mxu0 0.0
    %1859 = vmatpush.msra.mxu0 0.0
    %1860 = vmatpush.msra.mxu0 %v1817
    %1861 = vmatpush.msra.mxu0 %v1816
    %1862 = vmatpush.msra.mxu0 %v1815
    %1863 = vmatpush.msra.mxu0 %v1814
    %1864 = vmatmul.f32.gmra.mxu0 %v1846
    %v1865 = vpop.f32.mrf.mxu0
    %v1866 = vadd.f32 %v1840, %v1865
    %1867 = vdwg.mxu0
    %v1868 = vld [vmem:[#allocation13] sm:$0x1]
    %v1870 = vperm.slane %v1868, 0
    %v1872 = vadd.f32 %v1866, %v1870
    %v1873 = vsel %vm605, %v1872, -inf
    %1874 = vmax.xlane.f32.xlu0 %v1873
    %v1875 = vpop.xlane.xlu0 %1874
    %vm1876 = vcmp.eq.f32.partialorder %v1872, %v1875
    %v1877 = vsel %vm1876, %v222, 16
    %v1878 = vsel %vm605, %v1877, 2147483647
    %v1879 = vand.u32 %v1878, 65535
    %v1880 = vshra.s32 %v1878, 16
    %v1881 = vcvt.s32.f32 %v1879
    %v1882 = vcvt.s32.f32 %v1880
    %1883 = vmin.xlane.f32.xlu0 %v1882
    %v1884 = vpop.xlane.xlu0 %1883
    %vm1885 = vcmp.eq.f32.partialorder %v1882, %v1884
    %v1886 = vsel %vm1885, %v1881, inf
    %1887 = vmin.xlane.f32.xlu0 %v1886
    %v1888 = vpop.xlane.xlu0 %1887
    %v1889 = vcvt.f32.s32 %v1888
    %v1890 = vcvt.f32.s32 %v1884
    %v1891 = vshll.u32 %v1890, 16
    %v1892 = vadd.s32 %v1891, %v1889
    %v1893 = vsub.f32 %v1872, %v1875
    %v1894 = vmul.f32 %v1893, 1.442695
    %v1895 = vpow.pop %v1894
    %v1896 = vsel %vm605, %v1895, 0.0
    %1897 = vadd.xlane.f32.xlu0 %v1896
    %v1898 = vpop.xlane.xlu0 %1897
    %v1899 = vlog2.pop %v1898
    %v1900 = vmul.f32 %v1899, 0.6931472
    %v1901 = vsub.f32 %v1479, %v1900
    %v1902 = vmul.f32 %v1895, %v1893
    %v1903 = vsel %vm605, %v1902, 0.0
    %1904 = vadd.xlane.f32.xlu0 %v1903
    %v1905 = vpop.xlane.xlu0 %1904
    %v1906 = vrcp.pop %v1898
    %v1907 = vmul.f32 %v1898, %v1906
    %v1908 = vsub.f32 1.0, %v1907
    %v1909 = vmul.f32 %v1906, %v1908
    %v1910 = vadd.f32 %v1906, %v1909
    %vm1911 = vweird.f32 %v1898
    %vm1912 = vweird.f32 %v1906
    %vm1913 = vmor %vm1911, %vm1912
    %v1914 = vsel %vm1913, %v1906, %v1910
    %v1915 = vand.u32 2147483647, %v1898
    %vm1916 = vcmp.eq.f32.partialorder %v1915, 8.507059e+37
    %v1917 = vand.u32 %v1898, 2147483648
    %v1918 = vor.u32 1.1754944e-38, %v1917
    %v1919 = vsel %vm1916, %v1918, %v1914
    %v1920 = vmul.f32 %v1905, %v1919
    %v1921 = vsub.f32 %v1920, %v1900
    %v1922 = vadd.f32 %v1500, %v1921
    %vm1923 = vcmask 7168
    %v1924 = vsel %vm1923, %v625, %v1048
    %vm1925 = vcmask 15360
    %v1926 = vsel %vm1925, %v1924, %v1470
    %vm1927 = vcmask 23552
    %v1928 = vsel %vm1927, %v1926, %v1892
    %vm1929 = vcmask 25600
    %1930 = vst.msk [vmem:[#allocation15] sm:$0x3] %vm1929, %v1928
    %v1931 = vsel %vm1923, %v1922, %v1901
    %vm1932 = vcmask 9216
    %1933 = vst.msk [vmem:[%s19] sm:$0x3] %vm1932, %v1931
    // Predicated region
    $region94: #{attn_decoder_forward.1} parent=1 // pred_check
      _
    $region95: #{attn_decoder_forward.1} parent=1 // pred_check_branch
      %1935 = sbr.rel (0) target = $region97
    $region96: #{attn_decoder_forward.1} parent=1 // pred_region
      %1937 = vsyncadd [#allocation6], 0
      %s1939 = sshll.u32 [#allocation15], 4
      %s1940 = int_to_ptr.vmem [resolvable:$true] %s1939
      %s1941 = sshll.u32 %s17, 4
      %s1942 = int_to_ptr.hbm [resolvable:$true] %s1941
      %1944 = dma.vmem_to_hbm [thread:$0]  %s1940, 32, %s1942, [#allocation6]
    $region97: #{attn_decoder_forward.1} parent=1 // pred_fallthru
      _
    // Predicated region
    $region98: #{attn_decoder_forward.1} parent=1 // pred_check
      _
    $region99: #{attn_decoder_forward.1} parent=1 // pred_check_branch
      %1946 = sbr.rel (0) target = $region101
    $region100: #{attn_decoder_forward.1} parent=1 // pred_region
      %1948 = vsyncadd [#allocation17], 0
      %s1949 = sshll.u32 [#allocation16], 4
      %s1950 = int_to_ptr.vmem [resolvable:$true] %s1949
      %s1951 = sshll.u32 %s18, 4
      %s1952 = int_to_ptr.hbm [resolvable:$true] %s1951
      %1957 = dma.vmem_to_hbm [thread:$0]  %s1950, 128, %s1952, [#allocation17], 64, 64, 4
    $region101: #{attn_decoder_forward.1} parent=1 // pred_fallthru
      _
    // Predicated region
    $region102: #{attn_decoder_forward.1} parent=1 // pred_check
      _
    $region103: #{attn_decoder_forward.1} parent=1 // pred_check_branch
      %1959 = sbr.rel (0) target = $region105
    $region104: #{attn_decoder_forward.1} parent=1 // pred_region
      _
    $region105: #{attn_decoder_forward.1} parent=1 // pred_fallthru
      _
    // Predicated region
    $region106: #{attn_decoder_forward.1} parent=1 // pred_check
      _
    $region107: #{attn_decoder_forward.1} parent=1 // pred_check_branch
      %1961 = sbr.rel (0) target = $region109
    $region108: #{attn_decoder_forward.1} parent=1 // pred_region
      %1963 = dma.done [#allocation6], 32
    $region109: #{attn_decoder_forward.1} parent=1 // pred_fallthru
      _
    // Predicated region
    $region110: #{attn_decoder_forward.1} parent=1 // pred_check
      _
    $region111: #{attn_decoder_forward.1} parent=1 // pred_check_branch
      %1965 = sbr.rel (0) target = $region113
    $region112: #{attn_decoder_forward.1} parent=1 // pred_region
      %1967 = dma.done [#allocation17], 128
    $region113: #{attn_decoder_forward.1} parent=1 // pred_fallthru
      _
    // Predicated region
    $region114: #{attn_decoder_forward.1} parent=1 // pred_check
      _
    $region115: #{attn_decoder_forward.1} parent=1 // pred_check_branch
      %1969 = sbr.rel (0) target = $region117
    $region116: #{attn_decoder_forward.1} parent=1 // pred_region
      _
    $region117: #{attn_decoder_forward.1} parent=1 // pred_fallthru
      _
    %1970 = vsyncpa [#allocation5], 1
    %1971 = vsyncpa [#allocation8], 1
    %1972 = vsyncpa [#allocation11], 1
    %1973 = vsyncpa [#allocation14], 1
    %1974 = vsyncpa [#allocation6], 1
    %1975 = vsyncpa [#allocation17], 1

</llo_original>
